<compile_context>
chip_gen: v5e
topology: v5e:2x2
jax: 0.10.0
libtpu: 0.0.40
codegen_flags: <defaults>
</compile_context>

<pallas_src>
import functools

import jax
import jax.numpy as jnp
from jax.experimental import pallas as pl
from jax.experimental.pallas import tpu as pltpu

LANE = 128


def _round_up(v, m):
    return ((v + m - 1) // m) * m


def _nbytes(shape, dtype):
    n = 1
    for s in shape:
        n *= int(s)
    return n * jnp.dtype(dtype).itemsize


def _vmem_capacity_bytes(default=64 * 1024 * 1024):
    try:
        info = pltpu.get_tpu_info()
        return int(getattr(info, "vmem_capacity_bytes", default))
    except Exception:
        return default


# ----------------------------------------------------------------------------
# Pallas kernel
# ----------------------------------------------------------------------------
def gnn_kernel(x_in_ref, a_ref, pool_ref, inv_cnt_ref,
               w_in_ref, b_in_ref,
               w1_ref, t1_ref, w2_ref, t2_ref,
               w_out_ref, b_out_ref,
               out_ref,
               xbuf_ref, pool_acc_ref,
               *, n_layers, tm, a_resident):
    f32, bf16 = jnp.float32, jnp.bfloat16
    l = pl.program_id(0)                       # phase: 0 = lin_in, 1..L = GIN layer l-1
    i = pl.program_id(1)                       # destination-node tile
    n_tiles = pl.num_programs(1)
    row = pl.multiple_of(i * tm, tm)

    # ---- phase 0: x0 = lin_in(x) for this node tile -> ping buffer 0 -------
    @pl.when(l == 0)
    def _():
        x0 = jnp.dot(x_in_ref[...].astype(bf16), w_in_ref[...],
                     preferred_element_type=f32) + b_in_ref[...]
        xbuf_ref[0, pl.ds(row, tm), :] = x0.astype(bf16)

    # ---- phases 1..L: one GIN layer for this destination tile --------------
    @pl.when(l > 0)
    def _():
        src = (l - 1) & 1                      # buffer holding the layer input
        dst = l & 1                            # buffer receiving the layer output
        # tile-local residual / epilogue math in f32; stored activations are bf16
        skip = xbuf_ref[src, pl.ds(row, tm), :].astype(f32)          # [tm, Hp]
        if a_resident:
            a_tile = a_ref[pl.ds(row, tm), :]                        # [tm, Np] bf16
        else:
            a_tile = a_ref[...]                                      # [tm, Np] bf16
        # GIN aggregation (eps=0): (1+eps)*x_i + sum_j A[i,j] x_j
        # bf16 x bf16 on the MXU, f32 accumulation (no full-buffer cast).
        agg = skip + jnp.dot(a_tile, xbuf_ref[src],
                             preferred_element_type=f32)
        # GINConv nn: (Linear + BN1 folded) -> ReLU -> (Linear + outer BN folded)
        h = jnp.dot(agg.astype(bf16), w1_ref[...],
                    preferred_element_type=f32) + t1_ref[...]
        h = jnp.maximum(h, 0.0)
        h = jnp.dot(h.astype(bf16), w2_ref[...],
                    preferred_element_type=f32) + t2_ref[...]
        h = jnp.maximum(h, 0.0)
        # residual; F.dropout(training=False) == identity
        out_tile = h + skip                                          # f32 tile
        out_bf = out_tile.astype(bf16)

        @pl.when(l < n_layers)
        def _():                               # last layer's output is never re-read
            xbuf_ref[dst, pl.ds(row, tm), :] = out_bf

        # ---- fused per-tile global mean pooling during the last layer ------
        @pl.when(l == n_layers)
        def _():
            @pl.when(i == 0)
            def _():
                pool_acc_ref[...] = jnp.zeros_like(pool_acc_ref)
            pool_acc_ref[...] += jnp.dot(pool_ref[...], out_bf,
                                         preferred_element_type=f32)

            @pl.when(i == n_tiles - 1)
            def _():
                pooled = pool_acc_ref[...] * inv_cnt_ref[...]        # f32 mean
                out_ref[...] = jnp.dot(pooled.astype(bf16), w_out_ref[...],
                                       preferred_element_type=f32) + b_out_ref[...]


# ----------------------------------------------------------------------------
# Parameter folding / packing (bias + eval BatchNorm -> weights, bf16, padding)
# ----------------------------------------------------------------------------
def fold_and_pack_params(params):
    H = params["w_in"].shape[1]
    C = params["w_out"].shape[1]
    Hp, Cp = _round_up(H, LANE), _round_up(C, LANE)
    pad_h = Hp - H

    # y = (x @ W + b) * s + t  ==  x @ (W * s) + (b * s + t)
    w1 = params["w1"] * params["s1"]
    t1 = params["b1"] * params["s1"] + params["t1"]
    w2 = params["w2"] * params["s2"]
    t2 = params["b2"] * params["s2"] + params["t2"]

    packed = {
        "w_in": jnp.pad(params["w_in"], ((0, 0), (0, pad_h))).astype(jnp.bfloat16),
        "b_in": jnp.pad(params["b_in"], ((0, 0), (0, pad_h))),
        "w1": jnp.pad(w1, ((0, 0), (0, pad_h), (0, pad_h))).astype(jnp.bfloat16),
        "t1": jnp.pad(t1, ((0, 0), (0, 0), (0, pad_h))),
        "w2": jnp.pad(w2, ((0, 0), (0, pad_h), (0, pad_h))).astype(jnp.bfloat16),
        "t2": jnp.pad(t2, ((0, 0), (0, 0), (0, pad_h))),
        "w_out": jnp.pad(params["w_out"], ((0, pad_h), (0, Cp - C))).astype(jnp.bfloat16),
        "b_out": jnp.pad(params["b_out"], ((0, 0), (0, Cp - C))),
    }
    return packed, Hp, Cp


def advanced_gnn_forward(x, adj, batch, n_graphs, params, *, tm=None):
    N, d_in = x.shape
    n_classes = params["w_out"].shape[1]
    n_layers = int(params["w1"].shape[0])
    assert n_layers >= 1, "pooling is fused into the last GIN-layer phase"

    packed, Hp, Cp = fold_and_pack_params(params)

    # --- per-generation VMEM budget ------------------------------------------
    vmem_cap = _vmem_capacity_bytes()                       # 64 MiB on v7x
    vmem_budget = min(vmem_cap - 8 * 1024 * 1024, 112 * 1024 * 1024)

    if tm is None:
        tm = 128   # fills the v5e MXU; good default on v6e/v7x (sweep 256 there)

    # Pad node count to a tile multiple (padded nodes have no edges and are not
    # pooled, so they cannot influence real outputs).
    Np = _round_up(max(N, tm), tm)
    n_tiles = Np // tm

    x_p = jnp.pad(x, ((0, Np - N), (0, 0)))
    adj_p = jnp.pad(adj, ((0, Np - N), (0, Np - N))).astype(jnp.bfloat16)

    onehot = (batch[None, :] == jnp.arange(n_graphs)[:, None]).astype(jnp.float32)
    inv_cnt = 1.0 / onehot.sum(axis=1, keepdims=True)       # [G, 1] f32 (exact mean)
    pool_p = jnp.pad(onehot, ((0, 0), (0, Np - N))).astype(jnp.bfloat16)

    # --- static VMEM estimate: pin A in VMEM when it fits ---------------------
    per_step_blocks = (
        _nbytes((tm, d_in), jnp.float32)
        + _nbytes((n_graphs, tm), jnp.bfloat16)
        + _nbytes((n_graphs, 1), jnp.float32)
        + _nbytes((d_in, Hp), jnp.bfloat16) + _nbytes((1, Hp), jnp.float32)
        + 2 * _nbytes((Hp, Hp), jnp.bfloat16) + 2 * _nbytes((1, Hp), jnp.float32)
        + _nbytes((Hp, Cp), jnp.bfloat16) + _nbytes((1, Cp), jnp.float32)
        + _nbytes((n_graphs, Cp), jnp.float32)
    )
    scratch_bytes = (_nbytes((2, Np, Hp), jnp.bfloat16)
                     + _nbytes((n_graphs, Hp), jnp.float32))
    resident_need = scratch_bytes + 2 * (per_step_blocks + _nbytes((Np, Np), jnp.bfloat16))
    streamed_need = scratch_bytes + 2 * (per_step_blocks + _nbytes((tm, Np), jnp.bfloat16))
    a_resident = resident_need <= vmem_budget
    vmem_need = resident_need if a_resident else streamed_need
    vmem_limit = int(min(max(2 * vmem_need, 32 * 1024 * 1024), vmem_budget))

    grid = (n_layers + 1, n_tiles)

    # Phase l uses GIN layer l-1 weights (phase 0 pre-fetches layer 0's block).
    def wmap(l, i):
        return (jnp.maximum(l - 1, 0), 0, 0)

    def full(shape):
        return pl.BlockSpec(shape, lambda l, i: (0, 0))

    if a_resident:
        # Whole adjacency resident in VMEM -> A is read from HBM exactly once.
        a_spec = pl.BlockSpec((Np, Np), lambda l, i: (0, 0))
    else:
        # Stream a (tm, Np) destination stripe per (layer, dst tile).
        a_spec = pl.BlockSpec((tm, Np), lambda l, i: (jnp.where(l == 0, 0, i), 0))

    in_specs = [
        # node features: only needed in phase 0
        pl.BlockSpec((tm, d_in), lambda l, i: (jnp.where(l == 0, i, 0), 0)),
        a_spec,
        # pooling one-hot: streamed as (G, tm) column blocks during the last layer
        pl.BlockSpec((n_graphs, tm), lambda l, i: (0, jnp.where(l == n_layers, i, 0))),
        full((n_graphs, 1)),                   # 1 / nodes-per-graph (f32)
        full((d_in, Hp)),                      # w_in
        full((1, Hp)),                         # b_in
        pl.BlockSpec((None, Hp, Hp), wmap),    # w1  (BN1 folded)
        pl.BlockSpec((None, 1, Hp), wmap),     # t1
        pl.BlockSpec((None, Hp, Hp), wmap),    # w2  (outer BN folded)
        pl.BlockSpec((None, 1, Hp), wmap),     # t2
        full((Hp, Cp)),                        # w_out (class dim padded lane-dense)
        full((1, Cp)),                         # b_out
    ]
    out_spec = pl.BlockSpec((n_graphs, Cp), lambda l, i: (0, 0))

    flops = (2 * Np * d_in * Hp
             + n_layers * (2 * Np * Np * Hp + 4 * Np * Hp * Hp)
             + 2 * n_graphs * Np * Hp + 2 * n_graphs * Hp * Cp)
    a_reads = 1 if a_resident else max(n_layers, 1)
    bytes_accessed = int(
        x_p.size * 4 + adj_p.size * 2 * a_reads + pool_p.size * 2
        + inv_cnt.size * 4
        + sum(int(v.size) * v.dtype.itemsize for v in packed.values())
        + n_graphs * Cp * 4)

    kernel = functools.partial(gnn_kernel, n_layers=n_layers, tm=tm,
                               a_resident=a_resident)
    out = pl.pallas_call(
        kernel,
        out_shape=jax.ShapeDtypeStruct((n_graphs, Cp), jnp.float32),
        grid_spec=pltpu.PrefetchScalarGridSpec(
            num_scalar_prefetch=0,
            grid=grid,
            in_specs=in_specs,
            out_specs=out_spec,
            scratch_shapes=[
                pltpu.VMEM((2, Np, Hp), jnp.bfloat16),     # activation ping-pong (bf16)
                pltpu.VMEM((n_graphs, Hp), jnp.float32),   # pooled-sum accumulator (f32)
            ],
        ),
        compiler_params=pltpu.CompilerParams(
            # Both axes are sequential: every dst tile of layer l must be written
            # to the ping-pong buffer before layer l+1 reads it, and the pooling
            # accumulator sums over tiles.
            dimension_semantics=("arbitrary", "arbitrary"),
            vmem_limit_bytes=vmem_limit,
        ),
        cost_estimate=pl.CostEstimate(flops=int(flops), transcendentals=0,
                                      bytes_accessed=bytes_accessed),
    )(x_p, adj_p, pool_p, inv_cnt,
      packed["w_in"], packed["b_in"],
      packed["w1"], packed["t1"], packed["w2"], packed["t2"],
      packed["w_out"], packed["b_out"])
    return out[:, :n_classes]


# ----------------------------------------------------------------------------
# Deterministic parameters (PyTorch Linear-style init, weights stored [in,out]).
# BatchNorm1d eval with default state: scale = 1/sqrt(var+eps), shift = 0.
# ----------------------------------------------------------------------------
def linear_init(key, fan_in, fan_out):
    kw, kb = jax.random.split(key)
    bound = 1.0 / jnp.sqrt(jnp.float32(fan_in))
    w = jax.random.uniform(kw, (fan_in, fan_out), jnp.float32, -bound, bound)
    b = jax.random.uniform(kb, (1, fan_out), jnp.float32, -bound, bound)
    return w, b


def make_params(key, input_dim, hidden, n_classes, n_layers):
    keys = jax.random.split(key, 2 + 2 * n_layers)
    w_in, b_in = linear_init(keys[0], input_dim, hidden)
    w_out, b_out = linear_init(keys[1], hidden, n_classes)

    bn_eps = 1e-5
    s = jnp.full((1, hidden), 1.0 / jnp.sqrt(1.0 + bn_eps), jnp.float32)
    t = jnp.zeros((1, hidden), jnp.float32)

    w1s, b1s, w2s, b2s = [], [], [], []
    for l in range(n_layers):
        w1, b1 = linear_init(keys[2 + 2 * l], hidden, hidden)
        w2, b2 = linear_init(keys[3 + 2 * l], hidden, hidden)
        w1s.append(w1); b1s.append(b1); w2s.append(w2); b2s.append(b2)

    def stk(v):
        return jnp.broadcast_to(v, (n_layers,) + v.shape)

    return {
        "w_in": w_in, "b_in": b_in,
        "w1": jnp.stack(w1s), "b1": jnp.stack(b1s), "s1": stk(s), "t1": stk(t),
        "w2": jnp.stack(w2s), "b2": jnp.stack(b2s), "s2": stk(s), "t2": stk(t),
        "w_out": w_out, "b_out": b_out,
    }


# Pure-f32 JAX reference (unfolded params, module semantics) for fidelity check.
def reference_forward(x, adj, batch, n_graphs, params):
    onehot = (batch[None, :] == jnp.arange(n_graphs)[:, None]).astype(jnp.float32)
    pool = onehot / onehot.sum(axis=1, keepdims=True)
    h = x @ params["w_in"] + params["b_in"]
    for l in range(params["w1"].shape[0]):
        skip = h
        g = h + adj @ h
        g = g @ params["w1"][l] + params["b1"][l]
        g = jnp.maximum(g * params["s1"][l] + params["t1"][l], 0.0)
        g = g @ params["w2"][l] + params["b2"][l]
        g = jnp.maximum(g * params["s2"][l] + params["t2"][l], 0.0)
        h = g + skip
    return (pool @ h) @ params["w_out"] + params["b_out"]


if __name__ == "__main__":
    # Small problem: 2 graphs x 128 nodes (2 dst tiles at tm=128), input_dim=8,
    # hidden=32, 2 GIN layers, 1 class.
    N_NODES, INPUT_DIM, HIDDEN, N_CLASSES, N_LAYERS, N_GRAPHS = 256, 8, 32, 1, 2, 2
    per_graph = N_NODES // N_GRAPHS

    key = jax.random.PRNGKey(0)
    k_x, k_params = jax.random.split(key)

    x = jax.random.normal(k_x, (N_NODES, INPUT_DIM), jnp.float32)
    batch = jnp.repeat(jnp.arange(N_GRAPHS), per_graph)

    # Deterministic edges: bidirectional ring within each graph.
    nodes = jnp.arange(N_NODES)
    nxt = (nodes % per_graph + 1) % per_graph + (nodes // per_graph) * per_graph
    src = jnp.concatenate([nodes, nxt])
    dst = jnp.concatenate([nxt, nodes])
    edge_index = jnp.stack([src, dst])
    adj = jnp.zeros((N_NODES, N_NODES), jnp.float32).at[
        edge_index[1], edge_index[0]].add(1.0)          # A[dst, src]

    params = make_params(k_params, INPUT_DIM, HIDDEN, N_CLASSES, N_LAYERS)

    out = advanced_gnn_forward(x, adj, batch, N_GRAPHS, params)
    out = jax.block_until_ready(out)

    ref = reference_forward(x, adj, batch, N_GRAPHS, params)
    assert out.shape == (N_GRAPHS, N_CLASSES)
    # bf16 MXU operands + bf16 activation storage (f32 accumulation/epilogue)
    # -> looser tolerance than pure f32.
    assert jnp.allclose(out, ref, atol=5e-2, rtol=5e-2), (out, ref)

    print("KERNEL_OK")
</pallas_src>

<mosaic_0001>
module attributes {stable_mosaic.version = 11 : i64} {
  func.func @gnn_kernel(%arg0: i32, %arg1: i32, %arg2: memref<128x8xf32, #tpu.memory_space<vmem>>, %arg3: memref<256x256xbf16, #tpu.memory_space<vmem>>, %arg4: memref<2x128xbf16, #tpu.memory_space<vmem>>, %arg5: memref<2x1xf32, #tpu.memory_space<vmem>>, %arg6: memref<8x128xbf16, #tpu.memory_space<vmem>>, %arg7: memref<1x128xf32, #tpu.memory_space<vmem>>, %arg8: memref<1x128x128xbf16, #tpu.memory_space<vmem>>, %arg9: memref<1x1x128xf32, #tpu.memory_space<vmem>>, %arg10: memref<1x128x128xbf16, #tpu.memory_space<vmem>>, %arg11: memref<1x1x128xf32, #tpu.memory_space<vmem>>, %arg12: memref<128x128xbf16, #tpu.memory_space<vmem>>, %arg13: memref<1x128xf32, #tpu.memory_space<vmem>>, %arg14: memref<2x128xf32, #tpu.memory_space<vmem>>, %arg15: memref<2x256x128xbf16, #tpu.memory_space<vmem>>, %arg16: memref<2x128xf32, #tpu.memory_space<vmem>>) attributes {dimension_semantics = [#tpu.dimension_semantics<arbitrary>, #tpu.dimension_semantics<arbitrary>], iteration_bounds = array<i64: 3, 2>, scalar_prefetch = 0 : i64, scratch_operands = 2 : i64, tpu.core_type = #tpu.core_type<tc>, window_params = [{transform_indices = @transform_0, window_bounds = array<i64: 128, 8>}, {pipeline_mode = #tpu.pipeline_mode<synchronous>, transform_indices = @transform_1, window_bounds = array<i64: 256, 256>}, {transform_indices = @transform_2, window_bounds = array<i64: 2, 128>}, {pipeline_mode = #tpu.pipeline_mode<synchronous>, transform_indices = @transform_3, window_bounds = array<i64: 2, 1>}, {pipeline_mode = #tpu.pipeline_mode<synchronous>, transform_indices = @transform_4, window_bounds = array<i64: 8, 128>}, {pipeline_mode = #tpu.pipeline_mode<synchronous>, transform_indices = @transform_5, window_bounds = array<i64: 1, 128>}, {transform_indices = @transform_6, window_bounds = array<i64: 1, 128, 128>}, {transform_indices = @transform_7, window_bounds = array<i64: 1, 1, 128>}, {transform_indices = @transform_8, window_bounds = array<i64: 1, 128, 128>}, {transform_indices = @transform_9, window_bounds = array<i64: 1, 1, 128>}, {pipeline_mode = #tpu.pipeline_mode<synchronous>, transform_indices = @transform_10, window_bounds = array<i64: 128, 128>}, {pipeline_mode = #tpu.pipeline_mode<synchronous>, transform_indices = @transform_11, window_bounds = array<i64: 1, 128>}, {pipeline_mode = #tpu.pipeline_mode<synchronous>, transform_indices = @transform_12, window_bounds = array<i64: 2, 128>}]} {
    %c128_i32 = arith.constant 128 : i32
    %0 = arith.muli %arg1, %c128_i32 : i32
    %1 = tpu.assume_multiple %0, 128 : i32
    %c0_i32 = arith.constant 0 : i32
    %2 = arith.cmpi eq, %arg0, %c0_i32 : i32
    %3 = arith.extui %2 : i1 to i32
    %c0_i32_0 = arith.constant 0 : i32
    %4 = arith.cmpi ne, %3, %c0_i32_0 : i32
    scf.if %4 {
      %c0 = arith.constant 0 : index
      %c0_3 = arith.constant 0 : index
      %8 = vector.load %arg2[%c0, %c0_3] : memref<128x8xf32, #tpu.memory_space<vmem>>, vector<128x8xf32>
      %9 = arith.truncf %8 : vector<128x8xf32> to vector<128x8xbf16>
      %c0_4 = arith.constant 0 : index
      %c0_5 = arith.constant 0 : index
      %10 = vector.load %arg6[%c0_4, %c0_5] : memref<8x128xbf16, #tpu.memory_space<vmem>>, vector<8x128xbf16>
      %cst = arith.constant dense<0.000000e+00> : vector<128x128xf32>
      %11 = tpu.matmul %9, %10, %cst {dimension_numbers = #tpu.dot_dimension_numbers<[1], [0], [0], [1], [0, 0, 1, 1], [], []>} : vector<128x8xbf16>, vector<8x128xbf16>, vector<128x128xf32> -> vector<128x128xf32>
      %c0_6 = arith.constant 0 : index
      %c0_7 = arith.constant 0 : index
      %12 = vector.load %arg7[%c0_6, %c0_7] : memref<1x128xf32, #tpu.memory_space<vmem>>, vector<1x128xf32>
      %13 = vector.broadcast %12 : vector<1x128xf32> to vector<128x128xf32>
      %14 = arith.addf %11, %13 : vector<128x128xf32>
      %15 = arith.truncf %14 : vector<128x128xf32> to vector<128x128xbf16>
      %c0_8 = arith.constant 0 : index
      %16 = arith.index_cast %1 : i32 to index
      %c0_9 = arith.constant 0 : index
      %17 = vector.load %arg15[%c0_8, %16, %c0_9] : memref<2x256x128xbf16, #tpu.memory_space<vmem>>, vector<1x128x128xbf16>
      %18 = vector.shape_cast %17 : vector<1x128x128xbf16> to vector<128x128xbf16>
      %19 = vector.shape_cast %15 : vector<128x128xbf16> to vector<1x128x128xbf16>
      tpu.vector_store %arg15[%c0_8, %16, %c0_9], %19 {strides = array<i32>} : memref<2x256x128xbf16, #tpu.memory_space<vmem>>, vector<1x128x128xbf16>,
    } else {
    }
    %c0_i32_1 = arith.constant 0 : i32
    %5 = arith.cmpi sgt, %arg0, %c0_i32_1 : i32
    %6 = arith.extui %5 : i1 to i32
    %c0_i32_2 = arith.constant 0 : i32
    %7 = arith.cmpi ne, %6, %c0_i32_2 : i32
    scf.if %7 {
      %c1_i32 = arith.constant 1 : i32
      %8 = arith.subi %arg0, %c1_i32 : i32
      %c1_i32_3 = arith.constant 1 : i32
      %9 = arith.andi %8, %c1_i32_3 : i32
      %c1_i32_4 = arith.constant 1 : i32
      %10 = arith.andi %arg0, %c1_i32_4 : i32
      %11 = arith.index_cast %9 : i32 to index
      %12 = arith.index_cast %1 : i32 to index
      %c0 = arith.constant 0 : index
      %13 = vector.load %arg15[%11, %12, %c0] : memref<2x256x128xbf16, #tpu.memory_space<vmem>>, vector<1x128x128xbf16>
      %14 = vector.shape_cast %13 : vector<1x128x128xbf16> to vector<128x128xbf16>
      %15 = arith.extf %14 : vector<128x128xbf16> to vector<128x128xf32>
      %16 = arith.index_cast %1 : i32 to index
      %c0_5 = arith.constant 0 : index
      %17 = vector.load %arg3[%16, %c0_5] : memref<256x256xbf16, #tpu.memory_space<vmem>>, vector<128x256xbf16>
      %18 = arith.index_cast %9 : i32 to index
      %c0_6 = arith.constant 0 : index
      %c0_7 = arith.constant 0 : index
      %19 = vector.load %arg15[%18, %c0_6, %c0_7] : memref<2x256x128xbf16, #tpu.memory_space<vmem>>, vector<1x256x128xbf16>
      %20 = vector.shape_cast %19 : vector<1x256x128xbf16> to vector<256x128xbf16>
      %cst = arith.constant dense<0.000000e+00> : vector<128x128xf32>
      %21 = tpu.matmul %17, %20, %cst {dimension_numbers = #tpu.dot_dimension_numbers<[1], [0], [0], [1], [0, 0, 1, 1], [], []>} : vector<128x256xbf16>, vector<256x128xbf16>, vector<128x128xf32> -> vector<128x128xf32>
      %22 = arith.addf %15, %21 : vector<128x128xf32>
      %23 = arith.truncf %22 : vector<128x128xf32> to vector<128x128xbf16>
      %c0_8 = arith.constant 0 : index
      %c0_9 = arith.constant 0 : index
      %c0_10 = arith.constant 0 : index
      %24 = vector.load %arg8[%c0_8, %c0_9, %c0_10] : memref<1x128x128xbf16, #tpu.memory_space<vmem>>, vector<1x128x128xbf16>
      %25 = vector.shape_cast %24 : vector<1x128x128xbf16> to vector<128x128xbf16>
      %cst_11 = arith.constant dense<0.000000e+00> : vector<128x128xf32>
      %26 = tpu.matmul %23, %25, %cst_11 {dimension_numbers = #tpu.dot_dimension_numbers<[1], [0], [0], [1], [0, 0, 1, 1], [], []>} : vector<128x128xbf16>, vector<128x128xbf16>, vector<128x128xf32> -> vector<128x128xf32>
      %c0_12 = arith.constant 0 : index
      %c0_13 = arith.constant 0 : index
      %c0_14 = arith.constant 0 : index
      %27 = vector.load %arg9[%c0_12, %c0_13, %c0_14] : memref<1x1x128xf32, #tpu.memory_space<vmem>>, vector<1x1x128xf32>
      %28 = vector.shape_cast %27 : vector<1x1x128xf32> to vector<1x128xf32>
      %29 = vector.broadcast %28 : vector<1x128xf32> to vector<128x128xf32>
      %30 = arith.addf %26, %29 : vector<128x128xf32>
      %cst_15 = arith.constant 0.000000e+00 : f32
      %31 = vector.broadcast %cst_15 : f32 to vector<128x128xf32>
      %32 = arith.maximumf %30, %31 : vector<128x128xf32>
      %33 = arith.truncf %32 : vector<128x128xf32> to vector<128x128xbf16>
      %c0_16 = arith.constant 0 : index
      %c0_17 = arith.constant 0 : index
      %c0_18 = arith.constant 0 : index
      %34 = vector.load %arg10[%c0_16, %c0_17, %c0_18] : memref<1x128x128xbf16, #tpu.memory_space<vmem>>, vector<1x128x128xbf16>
      %35 = vector.shape_cast %34 : vector<1x128x128xbf16> to vector<128x128xbf16>
      %cst_19 = arith.constant dense<0.000000e+00> : vector<128x128xf32>
      %36 = tpu.matmul %33, %35, %cst_19 {dimension_numbers = #tpu.dot_dimension_numbers<[1], [0], [0], [1], [0, 0, 1, 1], [], []>} : vector<128x128xbf16>, vector<128x128xbf16>, vector<128x128xf32> -> vector<128x128xf32>
      %c0_20 = arith.constant 0 : index
      %c0_21 = arith.constant 0 : index
      %c0_22 = arith.constant 0 : index
      %37 = vector.load %arg11[%c0_20, %c0_21, %c0_22] : memref<1x1x128xf32, #tpu.memory_space<vmem>>, vector<1x1x128xf32>
      %38 = vector.shape_cast %37 : vector<1x1x128xf32> to vector<1x128xf32>
      %39 = vector.broadcast %38 : vector<1x128xf32> to vector<128x128xf32>
      %40 = arith.addf %36, %39 : vector<128x128xf32>
      %cst_23 = arith.constant 0.000000e+00 : f32
      %41 = vector.broadcast %cst_23 : f32 to vector<128x128xf32>
      %42 = arith.maximumf %40, %41 : vector<128x128xf32>
      %43 = arith.addf %42, %15 : vector<128x128xf32>
      %44 = arith.truncf %43 : vector<128x128xf32> to vector<128x128xbf16>
      %c2_i32 = arith.constant 2 : i32
      %45 = arith.cmpi slt, %arg0, %c2_i32 : i32
      %46 = arith.extui %45 : i1 to i32
      %c0_i32_24 = arith.constant 0 : i32
      %47 = arith.cmpi ne, %46, %c0_i32_24 : i32
      scf.if %47 {
        %51 = arith.index_cast %10 : i32 to index
        %52 = arith.index_cast %1 : i32 to index
        %c0_27 = arith.constant 0 : index
        %53 = vector.load %arg15[%51, %52, %c0_27] : memref<2x256x128xbf16, #tpu.memory_space<vmem>>, vector<1x128x128xbf16>
        %54 = vector.shape_cast %53 : vector<1x128x128xbf16> to vector<128x128xbf16>
        %55 = vector.shape_cast %44 : vector<128x128xbf16> to vector<1x128x128xbf16>
        tpu.vector_store %arg15[%51, %52, %c0_27], %55 {strides = array<i32>} : memref<2x256x128xbf16, #tpu.memory_space<vmem>>, vector<1x128x128xbf16>,
      } else {
      }
      %c2_i32_25 = arith.constant 2 : i32
      %48 = arith.cmpi eq, %arg0, %c2_i32_25 : i32
      %49 = arith.extui %48 : i1 to i32
      %c0_i32_26 = arith.constant 0 : i32
      %50 = arith.cmpi ne, %49, %c0_i32_26 : i32
      scf.if %50 {
        %c0_i32_27 = arith.constant 0 : i32
        %51 = arith.cmpi eq, %arg1, %c0_i32_27 : i32
        %52 = arith.extui %51 : i1 to i32
        %c0_i32_28 = arith.constant 0 : i32
        %53 = arith.cmpi ne, %52, %c0_i32_28 : i32
        scf.if %53 {
          %cst_38 = arith.constant 0.000000e+00 : f32
          %62 = vector.broadcast %cst_38 : f32 to vector<2x128xf32>
          %c0_39 = arith.constant 0 : index
          %c0_40 = arith.constant 0 : index
          %63 = vector.load %arg16[%c0_39, %c0_40] : memref<2x128xf32, #tpu.memory_space<vmem>>, vector<2x128xf32>
          tpu.vector_store %arg16[%c0_39, %c0_40], %62 {strides = array<i32>} : memref<2x128xf32, #tpu.memory_space<vmem>>, vector<2x128xf32>,
        } else {
        }
        %c0_29 = arith.constant 0 : index
        %c0_30 = arith.constant 0 : index
        %54 = vector.load %arg16[%c0_29, %c0_30] : memref<2x128xf32, #tpu.memory_space<vmem>>, vector<2x128xf32>
        %c0_31 = arith.constant 0 : index
        %c0_32 = arith.constant 0 : index
        %55 = vector.load %arg4[%c0_31, %c0_32] : memref<2x128xbf16, #tpu.memory_space<vmem>>, vector<2x128xbf16>
        %cst_33 = arith.constant dense<0.000000e+00> : vector<2x128xf32>
        %56 = tpu.matmul %55, %44, %cst_33 {dimension_numbers = #tpu.dot_dimension_numbers<[1], [0], [0], [1], [0, 0, 1, 1], [], []>} : vector<2x128xbf16>, vector<128x128xbf16>, vector<2x128xf32> -> vector<2x128xf32>
        %57 = arith.addf %54, %56 : vector<2x128xf32>
        %c0_34 = arith.constant 0 : index
        %c0_35 = arith.constant 0 : index
        %58 = vector.load %arg16[%c0_34, %c0_35] : memref<2x128xf32, #tpu.memory_space<vmem>>, vector<2x128xf32>
        tpu.vector_store %arg16[%c0_34, %c0_35], %57 {strides = array<i32>} : memref<2x128xf32, #tpu.memory_space<vmem>>, vector<2x128xf32>,
        %c1_i32_36 = arith.constant 1 : i32
        %59 = arith.cmpi eq, %arg1, %c1_i32_36 : i32
        %60 = arith.extui %59 : i1 to i32
        %c0_i32_37 = arith.constant 0 : i32
        %61 = arith.cmpi ne, %60, %c0_i32_37 : i32
        scf.if %61 {
          %c0_38 = arith.constant 0 : index
          %c0_39 = arith.constant 0 : index
          %62 = vector.load %arg16[%c0_38, %c0_39] : memref<2x128xf32, #tpu.memory_space<vmem>>, vector<2x128xf32>
          %c0_40 = arith.constant 0 : index
          %c0_41 = arith.constant 0 : index
          %63 = vector.load %arg5[%c0_40, %c0_41] : memref<2x1xf32, #tpu.memory_space<vmem>>, vector<2x1xf32>
          %64 = vector.broadcast %63 : vector<2x1xf32> to vector<2x128xf32>
          %65 = arith.mulf %62, %64 : vector<2x128xf32>
          %66 = arith.truncf %65 : vector<2x128xf32> to vector<2x128xbf16>
          %c0_42 = arith.constant 0 : index
          %c0_43 = arith.constant 0 : index
          %67 = vector.load %arg12[%c0_42, %c0_43] : memref<128x128xbf16, #tpu.memory_space<vmem>>, vector<128x128xbf16>
          %cst_44 = arith.constant dense<0.000000e+00> : vector<2x128xf32>
          %68 = tpu.matmul %66, %67, %cst_44 {dimension_numbers = #tpu.dot_dimension_numbers<[1], [0], [0], [1], [0, 0, 1, 1], [], []>} : vector<2x128xbf16>, vector<128x128xbf16>, vector<2x128xf32> -> vector<2x128xf32>
          %c0_45 = arith.constant 0 : index
          %c0_46 = arith.constant 0 : index
          %69 = vector.load %arg13[%c0_45, %c0_46] : memref<1x128xf32, #tpu.memory_space<vmem>>, vector<1x128xf32>
          %70 = vector.broadcast %69 : vector<1x128xf32> to vector<2x128xf32>
          %71 = arith.addf %68, %70 : vector<2x128xf32>
          %c0_47 = arith.constant 0 : index
          %c0_48 = arith.constant 0 : index
          %72 = vector.load %arg14[%c0_47, %c0_48] : memref<2x128xf32, #tpu.memory_space<vmem>>, vector<2x128xf32>
          tpu.vector_store %arg14[%c0_47, %c0_48], %71 {strides = array<i32>} : memref<2x128xf32, #tpu.memory_space<vmem>>, vector<2x128xf32>,
        } else {
        }
      } else {
      }
    } else {
    }
    return
  }
  func.func @transform_0(%arg0: i32, %arg1: i32) -> (i32, i32) {
    %c0_i32 = arith.constant 0 : i32
    %0 = arith.cmpi eq, %arg0, %c0_i32 : i32
    %c0_i32_0 = arith.constant 0 : i32
    %1 = arith.select %0, %arg1, %c0_i32_0 : i32
    %c0_i32_1 = arith.constant 0 : i32
    %c0_i32_2 = arith.constant 0 : i32
    return %1, %c0_i32_1 : i32, i32
  }
  func.func @transform_1(%arg0: i32, %arg1: i32) -> (i32, i32) {
    %c0_i32 = arith.constant 0 : i32
    %c0_i32_0 = arith.constant 0 : i32
    %c0_i32_1 = arith.constant 0 : i32
    return %c0_i32, %c0_i32_0 : i32, i32
  }
  func.func @transform_2(%arg0: i32, %arg1: i32) -> (i32, i32) {
    %c2_i32 = arith.constant 2 : i32
    %0 = arith.cmpi eq, %arg0, %c2_i32 : i32
    %c0_i32 = arith.constant 0 : i32
    %1 = arith.select %0, %arg1, %c0_i32 : i32
    %c0_i32_0 = arith.constant 0 : i32
    %c0_i32_1 = arith.constant 0 : i32
    return %c0_i32_0, %1 : i32, i32
  }
  func.func @transform_3(%arg0: i32, %arg1: i32) -> (i32, i32) {
    %c0_i32 = arith.constant 0 : i32
    %c0_i32_0 = arith.constant 0 : i32
    %c0_i32_1 = arith.constant 0 : i32
    return %c0_i32, %c0_i32_0 : i32, i32
  }
  func.func @transform_4(%arg0: i32, %arg1: i32) -> (i32, i32) {
    %c0_i32 = arith.constant 0 : i32
    %c0_i32_0 = arith.constant 0 : i32
    %c0_i32_1 = arith.constant 0 : i32
    return %c0_i32, %c0_i32_0 : i32, i32
  }
  func.func @transform_5(%arg0: i32, %arg1: i32) -> (i32, i32) {
    %c0_i32 = arith.constant 0 : i32
    %c0_i32_0 = arith.constant 0 : i32
    %c0_i32_1 = arith.constant 0 : i32
    return %c0_i32, %c0_i32_0 : i32, i32
  }
  func.func @transform_6(%arg0: i32, %arg1: i32) -> (i32, i32, i32) {
    %c1_i32 = arith.constant 1 : i32
    %0 = arith.subi %arg0, %c1_i32 : i32
    %c0_i32 = arith.constant 0 : i32
    %1 = arith.maxsi %0, %c0_i32 : i32
    %c0_i32_0 = arith.constant 0 : i32
    %c0_i32_1 = arith.constant 0 : i32
    %c0_i32_2 = arith.constant 0 : i32
    return %1, %c0_i32_0, %c0_i32_1 : i32, i32, i32
  }
  func.func @transform_7(%arg0: i32, %arg1: i32) -> (i32, i32, i32) {
    %c1_i32 = arith.constant 1 : i32
    %0 = arith.subi %arg0, %c1_i32 : i32
    %c0_i32 = arith.constant 0 : i32
    %1 = arith.maxsi %0, %c0_i32 : i32
    %c0_i32_0 = arith.constant 0 : i32
    %c0_i32_1 = arith.constant 0 : i32
    %c0_i32_2 = arith.constant 0 : i32
    return %1, %c0_i32_0, %c0_i32_1 : i32, i32, i32
  }
  func.func @transform_8(%arg0: i32, %arg1: i32) -> (i32, i32, i32) {
    %c1_i32 = arith.constant 1 : i32
    %0 = arith.subi %arg0, %c1_i32 : i32
    %c0_i32 = arith.constant 0 : i32
    %1 = arith.maxsi %0, %c0_i32 : i32
    %c0_i32_0 = arith.constant 0 : i32
    %c0_i32_1 = arith.constant 0 : i32
    %c0_i32_2 = arith.constant 0 : i32
    return %1, %c0_i32_0, %c0_i32_1 : i32, i32, i32
  }
  func.func @transform_9(%arg0: i32, %arg1: i32) -> (i32, i32, i32) {
    %c1_i32 = arith.constant 1 : i32
    %0 = arith.subi %arg0, %c1_i32 : i32
    %c0_i32 = arith.constant 0 : i32
    %1 = arith.maxsi %0, %c0_i32 : i32
    %c0_i32_0 = arith.constant 0 : i32
    %c0_i32_1 = arith.constant 0 : i32
    %c0_i32_2 = arith.constant 0 : i32
    return %1, %c0_i32_0, %c0_i32_1 : i32, i32, i32
  }
  func.func @transform_10(%arg0: i32, %arg1: i32) -> (i32, i32) {
    %c0_i32 = arith.constant 0 : i32
    %c0_i32_0 = arith.constant 0 : i32
    %c0_i32_1 = arith.constant 0 : i32
    return %c0_i32, %c0_i32_0 : i32, i32
  }
  func.func @transform_11(%arg0: i32, %arg1: i32) -> (i32, i32) {
    %c0_i32 = arith.constant 0 : i32
    %c0_i32_0 = arith.constant 0 : i32
    %c0_i32_1 = arith.constant 0 : i32
    return %c0_i32, %c0_i32_0 : i32, i32
  }
  func.func @transform_12(%arg0: i32, %arg1: i32) -> (i32, i32) {
    %c0_i32 = arith.constant 0 : i32
    %c0_i32_0 = arith.constant 0 : i32
    %c0_i32_1 = arith.constant 0 : i32
    return %c0_i32, %c0_i32_0 : i32, i32
  }
}

</mosaic_0001>

<llo_original>
// kernel: tpu_custom_call.1
$region0: #{tpu_custom_call.1}
  #allocation0 [shape = 'u32[]', space=smem, size = 0x4, offset = 0x4, fixed_abs, tag = 'smem constant byte address 0x4 - core index']
  #allocation1 [shape = 'u32[72,128]{1,0:T(1,128)}', space=vmem, size = 0x9000, scoped, tag = 'internal scratch']
  #allocation2 [shape = 'bf16[2,256,128]{2,1,0:T(8,128)(2,1)}', space=vmem, size = 0x20000, scoped, tag = 'scratch operand']
  #allocation3 [shape = 'f32[2,128]{1,0:T(2,128)}', space=vmem, size = 0x400, scoped, tag = 'scratch operand']
  %s0 = inlined_call_operand.vmem [shape: f32[256,8], index: 0, kind: input, shape index: {}]
  %s1 = inlined_call_operand.vmem [shape: bf16[256,256], index: 1, kind: input, shape index: {}]
  %s2 = inlined_call_operand.vmem [shape: bf16[2,256], index: 2, kind: input, shape index: {}]
  %s3 = inlined_call_operand.vmem [shape: f32[2,1], index: 3, kind: input, shape index: {}]
  %s4 = inlined_call_operand.vmem [shape: bf16[8,128], index: 4, kind: input, shape index: {}]
  %s5 = inlined_call_operand.vmem [shape: f32[1,128], index: 5, kind: input, shape index: {}]
  %s6 = inlined_call_operand.hbm [shape: bf16[2,128,128], index: 6, kind: input, shape index: {}]
  %s7 = inlined_call_operand.vmem [shape: f32[2,1,128], index: 7, kind: input, shape index: {}]
  %s8 = inlined_call_operand.hbm [shape: bf16[2,128,128], index: 8, kind: input, shape index: {}]
  %s9 = inlined_call_operand.vmem [shape: f32[2,1,128], index: 9, kind: input, shape index: {}]
  %s10 = inlined_call_operand.hbm [shape: bf16[128,128], index: 10, kind: input, shape index: {}]
  %s11 = inlined_call_operand.vmem [shape: f32[1,128], index: 11, kind: input, shape index: {}]
  %s12 = inlined_call_operand.hbm [shape: f32[2,128], index: 12, kind: output, shape index: {}]
  %s13 = sld [smem:[#allocation0]]
  $region117: #{tpu_custom_call.1} parent=0
    _
  %s15 = ssub.s32 1, %s13
  %s16 = scalar_select 0, %s15, %s13
  $region1: #{tpu_custom_call.1} parent=0
    #allocation4 [shape = 'u8[65536]{0}', space=vmem, size = 0x10000, scoped, tag = 'input window, operand 6']
    #allocation5 [shape = 's32[2]{0}', space=sflag, size = 0x8, scoped, tag = 'scoped memory for tpu_custom_call.1']
    #allocation6 [shape = 's32[2]{0}', space=sflag, size = 0x8, scoped, tag = 'scoped memory for tpu_custom_call.1']
    #allocation7 [shape = 'u8[65536]{0}', space=vmem, size = 0x10000, scoped, tag = 'input window, operand 8']
    #allocation8 [shape = 's32[2]{0}', space=sflag, size = 0x8, scoped, tag = 'scoped memory for tpu_custom_call.1']
    #allocation9 [shape = 'u8[32768]{0}', space=vmem, size = 0x8000, scoped, tag = 'input window, operand 10, single buffered']
    #allocation10 [shape = 'u8[1024]{0}', space=vmem, size = 0x400, scoped, tag = 'output window, operand 0, single buffered']
    %17 = vsyncpa [#allocation5], 0
    %s18 = scalar_lea.sflag [#allocation5], 1
    %19 = vsyncpa %s18, 0
    %20 = vsyncpa [#allocation8], 0
    %s21 = scalar_lea.sflag [#allocation8], 1
    %22 = vsyncpa %s21, 0
    %23 = vsyncpa [#allocation6], 0
    loop: start=0, step=1, limit=8
    $region2: #{tpu_custom_call.1} parent=1 // loop_pre_header
      _
    $region3: #{tpu_custom_call.1} parent=1 // loop_header
      %s25 = sphi 0, %s29
      %p26 = scmp.ge.s32.totalorder %s25, 8
      %s32 = sphi 0, %s44
      %s33 = sphi 0, %s40
      %s34 = sphi 0, %s32
      %s35 = sphi 0, %s33
      %s36 = sphi 0, %s34
      %s37 = sphi 0, %s35
      %s51 = sphi 0, %s53
      %s54 = sphi 0, %s51
      %s55 = sphi 0, %s54
      %s71 = sphi 0, %s55
      %s75 = sphi 0, %s75
      %s77 = sphi 0, %s75
      %s78 = sphi 0, %s77
      %s92 = sphi 0, %s78
      %s102 = sphi 0, %s104
      %s105 = sphi 0, %s102
      %s106 = sphi 0, %s105
      %s122 = sphi 0, %s106
      %s126 = sphi 0, %s126
      %s128 = sphi 0, %s126
      %s129 = sphi 0, %s128
      %s143 = sphi 0, %s129
      %s147 = sphi 0, %s147
      %s149 = sphi 0, %s147
      %s150 = sphi 0, %s149
      %s164 = sphi 0, %s150
      %s168 = sphi 0, %s168
      %s170 = sphi 0, %s168
      %s171 = sphi 0, %s170
      %s185 = sphi 0, %s171
      %s197 = sphi 0, %s199
      %s200 = sphi 0, %s197
      %s201 = sphi 0, %s200
      %s217 = sphi 0, %s201
      %s229 = sphi 0, %s231
      %s232 = sphi 0, %s229
      %s233 = sphi 0, %s232
      %s249 = sphi 0, %s233
      %s261 = sphi 0, %s263
      %s264 = sphi 0, %s261
      %s265 = sphi 0, %s264
      %s281 = sphi 0, %s265
      %s293 = sphi 0, %s295
      %s296 = sphi 0, %s293
      %s297 = sphi 0, %s296
      %s313 = sphi 0, %s297
      %s317 = sphi 0, %s317
      %s319 = sphi 0, %s317
      %s320 = sphi 0, %s319
      %s334 = sphi 0, %s320
      %s338 = sphi 0, %s338
      %s340 = sphi 0, %s338
      %s341 = sphi 0, %s340
      %s355 = sphi 0, %s341
      %s359 = sphi 0, %s359
      %s361 = sphi 0, %s359
      %s362 = sphi 0, %s361
      %s376 = sphi 0, %s362
    $region4: #{tpu_custom_call.1} parent=1 // loop_header_branch
      %28 = sbr.rel (%p26) target = $region8
    $region5: #{tpu_custom_call.1} parent=1 // loop_body
      %s30 = ssub.s32 %s25, 1
      %s31 = ssub.s32 %s25, 2
      %s38 = sadd.s32 1, %s33
      %p39 = scmp.ge.s32.totalorder %s38, 2
      %s40 = scalar_select %p39, 0, %s38
      %s41 = sadd.s32 1, %s32
      %s42 = scalar_select %p39, %s41, %s32
      %p43 = scmp.ge.s32.totalorder %s42, 3
      %s44 = scalar_select %p43, 0, %s42
      %p45 = scmp.eq.s32.totalorder %s32, 0
      %s46 = scalar_select %p45, %s33, 0
      %p47 = scmp.eq.s32.totalorder %s44, 0
      %s48 = scalar_select %p47, %s40, 0
      %s49 = ssub.s32 %s46, %s48
      %p50 = scmp.eq.s32.totalorder %s49, 0
      %s52 = sadd.s32 %s51, 1
      %s53 = scalar_select %p50, %s51, %s52
      %p56 = pneg %p50
      %p57 = scmp.eq.s32.totalorder %s25, 5
      %p58 = por %p56, %p57
      %p59 = scmp.ne.s32.totalorder %s51, %s54
      %p60 = scmp.eq.s32.totalorder %s25, 0
      %p61 = por %p59, %p60
      %p62 = scmp.ne.s32.totalorder %s51, %s54
      %p63 = scmp.eq.s32.totalorder %s30, 5
      %p64 = por %p62, %p63
      %p65 = scmp.ne.s32.totalorder %s54, %s55
      %p66 = scmp.eq.s32.totalorder %s30, 0
      %p67 = por %p65, %p66
      %p68 = scmp.ne.s32.totalorder %s54, %s55
      %p69 = scmp.eq.s32.totalorder %s31, 5
      %p70 = por %p68, %p69
      %p72 = scmp.ne.s32.totalorder %s55, %s71
      %p73 = scmp.eq.s32.totalorder %s31, 0
      %p74 = por %p72, %p73
      %s76 = sadd.s32 %s75, 1
      %p79 = scmp.eq.s32.totalorder %s25, 5
      %p80 = scmp.ne.s32.totalorder %s75, %s77
      %p81 = scmp.eq.s32.totalorder %s25, 0
      %p82 = por %p80, %p81
      %p83 = scmp.ne.s32.totalorder %s75, %s77
      %p84 = scmp.eq.s32.totalorder %s30, 5
      %p85 = por %p83, %p84
      %p86 = scmp.ne.s32.totalorder %s77, %s78
      %p87 = scmp.eq.s32.totalorder %s30, 0
      %p88 = por %p86, %p87
      %p89 = scmp.ne.s32.totalorder %s77, %s78
      %p90 = scmp.eq.s32.totalorder %s31, 5
      %p91 = por %p89, %p90
      %p93 = scmp.ne.s32.totalorder %s78, %s92
      %p94 = scmp.eq.s32.totalorder %s31, 0
      %p95 = por %p93, %p94
      %p96 = scmp.eq.s32.totalorder %s32, 2
      %s97 = scalar_select %p96, %s33, 0
      %p98 = scmp.eq.s32.totalorder %s44, 2
      %s99 = scalar_select %p98, %s40, 0
      %s100 = ssub.s32 %s97, %s99
      %p101 = scmp.eq.s32.totalorder %s100, 0
      %s103 = sadd.s32 %s102, 1
      %s104 = scalar_select %p101, %s102, %s103
      %p107 = pneg %p101
      %p108 = scmp.eq.s32.totalorder %s25, 5
      %p109 = por %p107, %p108
      %p110 = scmp.ne.s32.totalorder %s102, %s105
      %p111 = scmp.eq.s32.totalorder %s25, 0
      %p112 = por %p110, %p111
      %p113 = scmp.ne.s32.totalorder %s102, %s105
      %p114 = scmp.eq.s32.totalorder %s30, 5
      %p115 = por %p113, %p114
      %p116 = scmp.ne.s32.totalorder %s105, %s106
      %p117 = scmp.eq.s32.totalorder %s30, 0
      %p118 = por %p116, %p117
      %p119 = scmp.ne.s32.totalorder %s105, %s106
      %p120 = scmp.eq.s32.totalorder %s31, 5
      %p121 = por %p119, %p120
      %p123 = scmp.ne.s32.totalorder %s106, %s122
      %p124 = scmp.eq.s32.totalorder %s31, 0
      %p125 = por %p123, %p124
      %s127 = sadd.s32 %s126, 1
      %p130 = scmp.eq.s32.totalorder %s25, 5
      %p131 = scmp.ne.s32.totalorder %s126, %s128
      %p132 = scmp.eq.s32.totalorder %s25, 0
      %p133 = por %p131, %p132
      %p134 = scmp.ne.s32.totalorder %s126, %s128
      %p135 = scmp.eq.s32.totalorder %s30, 5
      %p136 = por %p134, %p135
      %p137 = scmp.ne.s32.totalorder %s128, %s129
      %p138 = scmp.eq.s32.totalorder %s30, 0
      %p139 = por %p137, %p138
      %p140 = scmp.ne.s32.totalorder %s128, %s129
      %p141 = scmp.eq.s32.totalorder %s31, 5
      %p142 = por %p140, %p141
      %p144 = scmp.ne.s32.totalorder %s129, %s143
      %p145 = scmp.eq.s32.totalorder %s31, 0
      %p146 = por %p144, %p145
      %s148 = sadd.s32 %s147, 1
      %p151 = scmp.eq.s32.totalorder %s25, 5
      %p152 = scmp.ne.s32.totalorder %s147, %s149
      %p153 = scmp.eq.s32.totalorder %s25, 0
      %p154 = por %p152, %p153
      %p155 = scmp.ne.s32.totalorder %s147, %s149
      %p156 = scmp.eq.s32.totalorder %s30, 5
      %p157 = por %p155, %p156
      %p158 = scmp.ne.s32.totalorder %s149, %s150
      %p159 = scmp.eq.s32.totalorder %s30, 0
      %p160 = por %p158, %p159
      %p161 = scmp.ne.s32.totalorder %s149, %s150
      %p162 = scmp.eq.s32.totalorder %s31, 5
      %p163 = por %p161, %p162
      %p165 = scmp.ne.s32.totalorder %s150, %s164
      %p166 = scmp.eq.s32.totalorder %s31, 0
      %p167 = por %p165, %p166
      %s169 = sadd.s32 %s168, 1
      %p172 = scmp.eq.s32.totalorder %s25, 5
      %p173 = scmp.ne.s32.totalorder %s168, %s170
      %p174 = scmp.eq.s32.totalorder %s25, 0
      %p175 = por %p173, %p174
      %p176 = scmp.ne.s32.totalorder %s168, %s170
      %p177 = scmp.eq.s32.totalorder %s30, 5
      %p178 = por %p176, %p177
      %p179 = scmp.ne.s32.totalorder %s170, %s171
      %p180 = scmp.eq.s32.totalorder %s30, 0
      %p181 = por %p179, %p180
      %p182 = scmp.ne.s32.totalorder %s170, %s171
      %p183 = scmp.eq.s32.totalorder %s31, 5
      %p184 = por %p182, %p183
      %p186 = scmp.ne.s32.totalorder %s171, %s185
      %p187 = scmp.eq.s32.totalorder %s31, 0
      %p188 = por %p186, %p187
      %s189 = ssub.s32 %s32, 1
      %p190 = scmp.gt.s32.totalorder %s189, 0
      %s191 = scalar_select %p190, %s189, 0
      %s192 = ssub.s32 %s44, 1
      %p193 = scmp.gt.s32.totalorder %s192, 0
      %s194 = scalar_select %p193, %s192, 0
      %s195 = ssub.s32 %s191, %s194
      %p196 = scmp.eq.s32.totalorder %s195, 0
      %s198 = sadd.s32 %s197, 1
      %s199 = scalar_select %p196, %s197, %s198
      %p202 = pneg %p196
      %p203 = scmp.eq.s32.totalorder %s25, 5
      %p204 = por %p202, %p203
      %p205 = scmp.ne.s32.totalorder %s197, %s200
      %p206 = scmp.eq.s32.totalorder %s25, 0
      %p207 = por %p205, %p206
      %p208 = scmp.ne.s32.totalorder %s197, %s200
      %p209 = scmp.eq.s32.totalorder %s30, 5
      %p210 = por %p208, %p209
      %p211 = scmp.ne.s32.totalorder %s200, %s201
      %p212 = scmp.eq.s32.totalorder %s30, 0
      %p213 = por %p211, %p212
      %p214 = scmp.ne.s32.totalorder %s200, %s201
      %p215 = scmp.eq.s32.totalorder %s31, 5
      %p216 = por %p214, %p215
      %p218 = scmp.ne.s32.totalorder %s201, %s217
      %p219 = scmp.eq.s32.totalorder %s31, 0
      %p220 = por %p218, %p219
      %s221 = ssub.s32 %s32, 1
      %p222 = scmp.gt.s32.totalorder %s221, 0
      %s223 = scalar_select %p222, %s221, 0
      %s224 = ssub.s32 %s44, 1
      %p225 = scmp.gt.s32.totalorder %s224, 0
      %s226 = scalar_select %p225, %s224, 0
      %s227 = ssub.s32 %s223, %s226
      %p228 = scmp.eq.s32.totalorder %s227, 0
      %s230 = sadd.s32 %s229, 1
      %s231 = scalar_select %p228, %s229, %s230
      %p234 = pneg %p228
      %p235 = scmp.eq.s32.totalorder %s25, 5
      %p236 = por %p234, %p235
      %p237 = scmp.ne.s32.totalorder %s229, %s232
      %p238 = scmp.eq.s32.totalorder %s25, 0
      %p239 = por %p237, %p238
      %p240 = scmp.ne.s32.totalorder %s229, %s232
      %p241 = scmp.eq.s32.totalorder %s30, 5
      %p242 = por %p240, %p241
      %p243 = scmp.ne.s32.totalorder %s232, %s233
      %p244 = scmp.eq.s32.totalorder %s30, 0
      %p245 = por %p243, %p244
      %p246 = scmp.ne.s32.totalorder %s232, %s233
      %p247 = scmp.eq.s32.totalorder %s31, 5
      %p248 = por %p246, %p247
      %p250 = scmp.ne.s32.totalorder %s233, %s249
      %p251 = scmp.eq.s32.totalorder %s31, 0
      %p252 = por %p250, %p251
      %s253 = ssub.s32 %s32, 1
      %p254 = scmp.gt.s32.totalorder %s253, 0
      %s255 = scalar_select %p254, %s253, 0
      %s256 = ssub.s32 %s44, 1
      %p257 = scmp.gt.s32.totalorder %s256, 0
      %s258 = scalar_select %p257, %s256, 0
      %s259 = ssub.s32 %s255, %s258
      %p260 = scmp.eq.s32.totalorder %s259, 0
      %s262 = sadd.s32 %s261, 1
      %s263 = scalar_select %p260, %s261, %s262
      %p266 = pneg %p260
      %p267 = scmp.eq.s32.totalorder %s25, 5
      %p268 = por %p266, %p267
      %p269 = scmp.ne.s32.totalorder %s261, %s264
      %p270 = scmp.eq.s32.totalorder %s25, 0
      %p271 = por %p269, %p270
      %p272 = scmp.ne.s32.totalorder %s261, %s264
      %p273 = scmp.eq.s32.totalorder %s30, 5
      %p274 = por %p272, %p273
      %p275 = scmp.ne.s32.totalorder %s264, %s265
      %p276 = scmp.eq.s32.totalorder %s30, 0
      %p277 = por %p275, %p276
      %p278 = scmp.ne.s32.totalorder %s264, %s265
      %p279 = scmp.eq.s32.totalorder %s31, 5
      %p280 = por %p278, %p279
      %p282 = scmp.ne.s32.totalorder %s265, %s281
      %p283 = scmp.eq.s32.totalorder %s31, 0
      %p284 = por %p282, %p283
      %s285 = ssub.s32 %s32, 1
      %p286 = scmp.gt.s32.totalorder %s285, 0
      %s287 = scalar_select %p286, %s285, 0
      %s288 = ssub.s32 %s44, 1
      %p289 = scmp.gt.s32.totalorder %s288, 0
      %s290 = scalar_select %p289, %s288, 0
      %s291 = ssub.s32 %s287, %s290
      %p292 = scmp.eq.s32.totalorder %s291, 0
      %s294 = sadd.s32 %s293, 1
      %s295 = scalar_select %p292, %s293, %s294
      %p298 = pneg %p292
      %p299 = scmp.eq.s32.totalorder %s25, 5
      %p300 = por %p298, %p299
      %p301 = scmp.ne.s32.totalorder %s293, %s296
      %p302 = scmp.eq.s32.totalorder %s25, 0
      %p303 = por %p301, %p302
      %p304 = scmp.ne.s32.totalorder %s293, %s296
      %p305 = scmp.eq.s32.totalorder %s30, 5
      %p306 = por %p304, %p305
      %p307 = scmp.ne.s32.totalorder %s296, %s297
      %p308 = scmp.eq.s32.totalorder %s30, 0
      %p309 = por %p307, %p308
      %p310 = scmp.ne.s32.totalorder %s296, %s297
      %p311 = scmp.eq.s32.totalorder %s31, 5
      %p312 = por %p310, %p311
      %p314 = scmp.ne.s32.totalorder %s297, %s313
      %p315 = scmp.eq.s32.totalorder %s31, 0
      %p316 = por %p314, %p315
      %s318 = sadd.s32 %s317, 1
      %p321 = scmp.eq.s32.totalorder %s25, 5
      %p322 = scmp.ne.s32.totalorder %s317, %s319
      %p323 = scmp.eq.s32.totalorder %s25, 0
      %p324 = por %p322, %p323
      %p325 = scmp.ne.s32.totalorder %s317, %s319
      %p326 = scmp.eq.s32.totalorder %s30, 5
      %p327 = por %p325, %p326
      %p328 = scmp.ne.s32.totalorder %s319, %s320
      %p329 = scmp.eq.s32.totalorder %s30, 0
      %p330 = por %p328, %p329
      %p331 = scmp.ne.s32.totalorder %s319, %s320
      %p332 = scmp.eq.s32.totalorder %s31, 5
      %p333 = por %p331, %p332
      %p335 = scmp.ne.s32.totalorder %s320, %s334
      %p336 = scmp.eq.s32.totalorder %s31, 0
      %p337 = por %p335, %p336
      %s339 = sadd.s32 %s338, 1
      %p342 = scmp.eq.s32.totalorder %s25, 5
      %p343 = scmp.ne.s32.totalorder %s338, %s340
      %p344 = scmp.eq.s32.totalorder %s25, 0
      %p345 = por %p343, %p344
      %p346 = scmp.ne.s32.totalorder %s338, %s340
      %p347 = scmp.eq.s32.totalorder %s30, 5
      %p348 = por %p346, %p347
      %p349 = scmp.ne.s32.totalorder %s340, %s341
      %p350 = scmp.eq.s32.totalorder %s30, 0
      %p351 = por %p349, %p350
      %p352 = scmp.ne.s32.totalorder %s340, %s341
      %p353 = scmp.eq.s32.totalorder %s31, 5
      %p354 = por %p352, %p353
      %p356 = scmp.ne.s32.totalorder %s341, %s355
      %p357 = scmp.eq.s32.totalorder %s31, 0
      %p358 = por %p356, %p357
      %s360 = sadd.s32 %s359, 1
      %p363 = scmp.eq.s32.totalorder %s25, 5
      %p364 = scmp.ne.s32.totalorder %s359, %s361
      %p365 = scmp.eq.s32.totalorder %s25, 0
      %p366 = por %p364, %p365
      %p367 = scmp.ne.s32.totalorder %s359, %s361
      %p368 = scmp.eq.s32.totalorder %s30, 5
      %p369 = por %p367, %p368
      %p370 = scmp.ne.s32.totalorder %s361, %s362
      %p371 = scmp.eq.s32.totalorder %s30, 0
      %p372 = por %p370, %p371
      %p373 = scmp.ne.s32.totalorder %s361, %s362
      %p374 = scmp.eq.s32.totalorder %s31, 5
      %p375 = por %p373, %p374
      %p377 = scmp.ne.s32.totalorder %s362, %s376
      %p378 = scmp.eq.s32.totalorder %s31, 0
      %p379 = por %p377, %p378
      %p380 = scmp.le.s32.totalorder 1, %s25
      %p381 = scmp.lt.s32.totalorder %s25, 7
      %p382 = pnand %p380, %p381
      %p383 = pneg %p382
      // Predicated region
      $region9: #{tpu_custom_call.1} parent=5 // pred_check
        _
      $region10: #{tpu_custom_call.1} parent=5 // pred_check_branch
        %385 = sbr.rel (%p382) target = $region12
      $region11: #{tpu_custom_call.1} parent=5 // pred_region
        %s386 = ssub.s32 %s25, 1
        // Predicated region
        $region13: #{tpu_custom_call.1} parent=11 // pred_check
          %p387 = pneg %p88
        $region14: #{tpu_custom_call.1} parent=11 // pred_check_branch
          %389 = sbr.rel (%p387) target = $region16
        $region15: #{tpu_custom_call.1} parent=11 // pred_region
          _
        $region16: #{tpu_custom_call.1} parent=11 // pred_fallthru
          _
        // Predicated region
        $region17: #{tpu_custom_call.1} parent=11 // pred_check
          %p390 = pneg %p139
        $region18: #{tpu_custom_call.1} parent=11 // pred_check_branch
          %392 = sbr.rel (%p390) target = $region20
        $region19: #{tpu_custom_call.1} parent=11 // pred_region
          _
        $region20: #{tpu_custom_call.1} parent=11 // pred_fallthru
          _
        // Predicated region
        $region21: #{tpu_custom_call.1} parent=11 // pred_check
          %p393 = pneg %p160
        $region22: #{tpu_custom_call.1} parent=11 // pred_check_branch
          %395 = sbr.rel (%p393) target = $region24
        $region23: #{tpu_custom_call.1} parent=11 // pred_region
          _
        $region24: #{tpu_custom_call.1} parent=11 // pred_fallthru
          _
        // Predicated region
        $region25: #{tpu_custom_call.1} parent=11 // pred_check
          %p396 = pneg %p181
        $region26: #{tpu_custom_call.1} parent=11 // pred_check_branch
          %398 = sbr.rel (%p396) target = $region28
        $region27: #{tpu_custom_call.1} parent=11 // pred_region
          _
        $region28: #{tpu_custom_call.1} parent=11 // pred_fallthru
          _
        // Predicated region
        $region29: #{tpu_custom_call.1} parent=11 // pred_check
          %p399 = pneg %p330
        $region30: #{tpu_custom_call.1} parent=11 // pred_check_branch
          %401 = sbr.rel (%p399) target = $region32
        $region31: #{tpu_custom_call.1} parent=11 // pred_region
          %403 = vsyncadd [#allocation8], 0
          %s404 = sshll.u32 %s10, 4
          %s405 = int_to_ptr.hbm [resolvable:$true] %s404
          %s406 = sshll.u32 [#allocation9], 4
          %s407 = int_to_ptr.vmem [resolvable:$true] %s406
          %412 = dma.hbm_to_vmem [thread:$0]  %s405, 1024, %s407, [#allocation8], 64, 64, 4
        $region32: #{tpu_custom_call.1} parent=11 // pred_fallthru
          _
        // Predicated region
        $region33: #{tpu_custom_call.1} parent=11 // pred_check
          %p413 = pneg %p351
        $region34: #{tpu_custom_call.1} parent=11 // pred_check_branch
          %415 = sbr.rel (%p413) target = $region36
        $region35: #{tpu_custom_call.1} parent=11 // pred_region
          _
        $region36: #{tpu_custom_call.1} parent=11 // pred_fallthru
          _
      $region12: #{tpu_custom_call.1} parent=5 // pred_fallthru
        _
      %p416 = scmp.lt.s32.totalorder %s25, 6
      // Predicated region
      $region37: #{tpu_custom_call.1} parent=5 // pred_check
        %p417 = pneg %p416
      $region38: #{tpu_custom_call.1} parent=5 // pred_check_branch
        %419 = sbr.rel (%p417) target = $region40
      $region39: #{tpu_custom_call.1} parent=5 // pred_region
        // Predicated region
        $region41: #{tpu_custom_call.1} parent=39 // pred_check
          %p420 = pneg %p61
        $region42: #{tpu_custom_call.1} parent=39 // pred_check_branch
          %422 = sbr.rel (%p420) target = $region44
        $region43: #{tpu_custom_call.1} parent=39 // pred_region
          %p423 = scmp.eq.s32.totalorder %s32, 0
          %s424 = scalar_select %p423, %s33, 0
          %s425 = smul.u32 16, %s424
          %p426 = scmp.lt.s32.totalorder %s425, 31
          %s427 = scalar_select %p426, %s425, 31
          %s428 = smul.addr %s427, 8
          %s429 = scalar_lea.vmem %s0, %s428
          %p430 = scmp.eq.s32.totalorder %s32, 0
          %s431 = scalar_select %p430, %s33, 0
          %s432 = smul.u32 16, %s431
        $region44: #{tpu_custom_call.1} parent=39 // pred_fallthru
          _
        // Predicated region
        $region45: #{tpu_custom_call.1} parent=39 // pred_check
          %p433 = pneg %p112
        $region46: #{tpu_custom_call.1} parent=39 // pred_check_branch
          %435 = sbr.rel (%p433) target = $region48
        $region47: #{tpu_custom_call.1} parent=39 // pred_region
          %p436 = scmp.eq.s32.totalorder %s32, 2
          %s437 = scalar_select %p436, %s33, 0
          %p438 = scmp.lt.s32.totalorder %s437, 1
          %s439 = scalar_select %p438, %s437, 1
          %s440 = scalar_lea.vmem %s2, %s439
          %p441 = scmp.eq.s32.totalorder %s32, 2
          %s442 = scalar_select %p441, %s33, 0
        $region48: #{tpu_custom_call.1} parent=39 // pred_fallthru
          _
        // Predicated region
        $region49: #{tpu_custom_call.1} parent=39 // pred_check
          %p443 = pneg %p207
        $region50: #{tpu_custom_call.1} parent=39 // pred_check_branch
          %445 = sbr.rel (%p443) target = $region52
        $region51: #{tpu_custom_call.1} parent=39 // pred_region
          %s446 = sand.u32 %s197, 1
          %s447 = scalar_lea.sflag [#allocation5], %s446
          %s448 = sand.u32 %s197, 1
          %s449 = smul.addr %s448, 64
          %s450 = scalar_lea.vmem [#allocation4], %s449
          %s451 = ssub.s32 %s32, 1
          %p452 = scmp.gt.s32.totalorder %s451, 0
          %s453 = scalar_select %p452, %s451, 0
          %455 = vsyncadd %s447, 0
          %s456 = smul.addr %s453, 16
          %s457 = smul.addr %s456, 4
          %s458 = scalar_lea.hbm %s6, %s457
          %s459 = sshll.u32 %s458, 4
          %s460 = int_to_ptr.hbm [resolvable:$true] %s459
          %s461 = sshll.u32 %s450, 4
          %s462 = int_to_ptr.vmem [resolvable:$true] %s461
          %467 = dma.hbm_to_vmem [thread:$0]  %s460, 1024, %s462, %s447, 64, 64, 4
        $region52: #{tpu_custom_call.1} parent=39 // pred_fallthru
          _
        // Predicated region
        $region53: #{tpu_custom_call.1} parent=39 // pred_check
          %p468 = pneg %p239
        $region54: #{tpu_custom_call.1} parent=39 // pred_check_branch
          %470 = sbr.rel (%p468) target = $region56
        $region55: #{tpu_custom_call.1} parent=39 // pred_region
          %s471 = ssub.s32 %s32, 1
          %p472 = scmp.gt.s32.totalorder %s471, 0
          %s473 = scalar_select %p472, %s471, 0
          %p474 = scmp.lt.s32.totalorder %s473, 1
          %s475 = scalar_select %p474, %s473, 1
          %s476 = scalar_lea.vmem %s7, %s475
          %s477 = ssub.s32 %s32, 1
          %p478 = scmp.gt.s32.totalorder %s477, 0
          %s479 = scalar_select %p478, %s477, 0
        $region56: #{tpu_custom_call.1} parent=39 // pred_fallthru
          _
        // Predicated region
        $region57: #{tpu_custom_call.1} parent=39 // pred_check
          %p480 = pneg %p271
        $region58: #{tpu_custom_call.1} parent=39 // pred_check_branch
          %482 = sbr.rel (%p480) target = $region60
        $region59: #{tpu_custom_call.1} parent=39 // pred_region
          %s483 = sand.u32 %s25, 1
          %s484 = scalar_lea.sflag [#allocation8], %s483
          %s485 = sand.u32 %s261, 1
          %s486 = smul.addr %s485, 64
          %s487 = scalar_lea.vmem [#allocation7], %s486
          %s488 = ssub.s32 %s32, 1
          %p489 = scmp.gt.s32.totalorder %s488, 0
          %s490 = scalar_select %p489, %s488, 0
          %492 = vsyncadd %s484, 0
          %s493 = smul.addr %s490, 16
          %s494 = smul.addr %s493, 4
          %s495 = scalar_lea.hbm %s8, %s494
          %s496 = sshll.u32 %s495, 4
          %s497 = int_to_ptr.hbm [resolvable:$true] %s496
          %s498 = sshll.u32 %s487, 4
          %s499 = int_to_ptr.vmem [resolvable:$true] %s498
          %504 = dma.hbm_to_vmem [thread:$0]  %s497, 1024, %s499, %s484, 64, 64, 4
        $region60: #{tpu_custom_call.1} parent=39 // pred_fallthru
          _
        // Predicated region
        $region61: #{tpu_custom_call.1} parent=39 // pred_check
          %p505 = pneg %p303
        $region62: #{tpu_custom_call.1} parent=39 // pred_check_branch
          %507 = sbr.rel (%p505) target = $region64
        $region63: #{tpu_custom_call.1} parent=39 // pred_region
          %s508 = ssub.s32 %s32, 1
          %p509 = scmp.gt.s32.totalorder %s508, 0
          %s510 = scalar_select %p509, %s508, 0
          %p511 = scmp.lt.s32.totalorder %s510, 1
          %s512 = scalar_select %p511, %s510, 1
          %s513 = scalar_lea.vmem %s9, %s512
          %s514 = ssub.s32 %s32, 1
          %p515 = scmp.gt.s32.totalorder %s514, 0
          %s516 = scalar_select %p515, %s514, 0
        $region64: #{tpu_custom_call.1} parent=39 // pred_fallthru
          _
      $region40: #{tpu_custom_call.1} parent=5 // pred_fallthru
        _
      %p517 = scmp.le.s32.totalorder 1, %s25
      %p518 = scmp.lt.s32.totalorder %s25, 7
      %p519 = pnand %p517, %p518
      %p520 = pneg %p519
      // Predicated region
      $region65: #{tpu_custom_call.1} parent=5 // pred_check
        _
      $region66: #{tpu_custom_call.1} parent=5 // pred_check_branch
        %522 = sbr.rel (%p519) target = $region68
      $region67: #{tpu_custom_call.1} parent=5 // pred_region
        %s523 = ssub.s32 %s25, 1
        %s524 = sand.u32 %s200, 1
        %s525 = scalar_lea.sflag [#allocation5], %s524
        %s526 = sand.u32 %s200, 1
        %s527 = smul.addr %s526, 64
        %s528 = scalar_lea.vmem [#allocation4], %s527
        // Predicated region
        $region69: #{tpu_custom_call.1} parent=67 // pred_check
          %p529 = pneg %p213
        $region70: #{tpu_custom_call.1} parent=67 // pred_check_branch
          %531 = sbr.rel (%p529) target = $region72
        $region71: #{tpu_custom_call.1} parent=67 // pred_region
          %533 = dma.done %s525, 1024
        $region72: #{tpu_custom_call.1} parent=67 // pred_fallthru
          _
        %s534 = sand.u32 %s30, 1
        %s535 = scalar_lea.sflag [#allocation8], %s534
        %s536 = sand.u32 %s264, 1
        %s537 = smul.addr %s536, 64
        %s538 = scalar_lea.vmem [#allocation7], %s537
        // Predicated region
        $region73: #{tpu_custom_call.1} parent=67 // pred_check
          %p539 = pneg %p277
        $region74: #{tpu_custom_call.1} parent=67 // pred_check_branch
          %541 = sbr.rel (%p539) target = $region76
        $region75: #{tpu_custom_call.1} parent=67 // pred_region
          %543 = dma.done %s535, 1024
        $region76: #{tpu_custom_call.1} parent=67 // pred_fallthru
          _
        // Predicated region
        $region77: #{tpu_custom_call.1} parent=67 // pred_check
          %p544 = pneg %p330
        $region78: #{tpu_custom_call.1} parent=67 // pred_check_branch
          %546 = sbr.rel (%p544) target = $region80
        $region79: #{tpu_custom_call.1} parent=67 // pred_region
          %548 = dma.done [#allocation8], 1024
        $region80: #{tpu_custom_call.1} parent=67 // pred_fallthru
          _
        %p549 = scmp.eq.s32.totalorder %s34, 0
        %s550 = scalar_select %p549, %s35, 0
        %s551 = smul.u32 16, %s550
        %p552 = scmp.lt.s32.totalorder %s551, 31
        %s553 = scalar_select %p552, %s551, 31
        %s554 = smul.addr %s553, 8
        %s555 = scalar_lea.vmem %s0, %s554
        %p556 = pneg %p67
        %p557 = pneg %p64
        %p558 = pneg %p88
        %p559 = pneg %p85
        %p560 = scmp.eq.s32.totalorder %s34, 2
        %s561 = scalar_select %p560, %s35, 0
        %p562 = scmp.lt.s32.totalorder %s561, 1
        %s563 = scalar_select %p562, %s561, 1
        %s564 = scalar_lea.vmem %s2, %s563
        %p565 = pneg %p118
        %p566 = pneg %p115
        %p567 = pneg %p139
        %p568 = pneg %p136
        %p569 = pneg %p160
        %p570 = pneg %p157
        %p571 = pneg %p181
        %p572 = pneg %p178
        %s573 = sand.u32 %s200, 1
        %s574 = scalar_lea.sflag [#allocation5], %s573
        %s575 = sand.u32 %s200, 1
        %s576 = smul.addr %s575, 64
        %s577 = scalar_lea.vmem [#allocation4], %s576
        %p578 = pneg %p213
        %p579 = pneg %p210
        %s580 = ssub.s32 %s34, 1
        %p581 = scmp.gt.s32.totalorder %s580, 0
        %s582 = scalar_select %p581, %s580, 0
        %p583 = scmp.lt.s32.totalorder %s582, 1
        %s584 = scalar_select %p583, %s582, 1
        %s585 = scalar_lea.vmem %s7, %s584
        %p586 = pneg %p245
        %p587 = pneg %p242
        %s588 = sand.u32 %s30, 1
        %s589 = scalar_lea.sflag [#allocation8], %s588
        %s590 = sand.u32 %s264, 1
        %s591 = smul.addr %s590, 64
        %s592 = scalar_lea.vmem [#allocation7], %s591
        %p593 = pneg %p277
        %p594 = pneg %p274
        %s595 = ssub.s32 %s34, 1
        %p596 = scmp.gt.s32.totalorder %s595, 0
        %s597 = scalar_select %p596, %s595, 0
        %p598 = scmp.lt.s32.totalorder %s597, 1
        %s599 = scalar_select %p598, %s597, 1
        %s600 = scalar_lea.vmem %s9, %s599
        %p601 = pneg %p309
        %p602 = pneg %p306
        %p603 = pneg %p330
        %p604 = pneg %p327
        %p605 = pneg %p351
        %p606 = pneg %p348
        %p607 = pneg %p372
        %p608 = pneg %p369
        %p609 = scmp.eq.s32.totalorder %s34, 0
        %s610 = scalar_select %p609, %s35, 0
        %s611 = smul.u32 16, %s610
        %p612 = scmp.lt.s32.totalorder %s611, 31
        %s613 = scalar_select %p612, %s611, 31
        %s614 = smul.addr %s613, 8
        %s615 = scalar_lea.vmem %s0, %s614
        %p616 = scmp.eq.s32.totalorder %s34, 0
        %s617 = scalar_select %p616, %s35, 0
        %s618 = smul.u32 16, %s617
        %p619 = scmp.eq.s32.totalorder %s34, 2
        %s620 = scalar_select %p619, %s35, 0
        %p621 = scmp.lt.s32.totalorder %s620, 1
        %s622 = scalar_select %p621, %s620, 1
        %s623 = scalar_lea.vmem %s2, %s622
        %p624 = scmp.eq.s32.totalorder %s34, 2
        %s625 = scalar_select %p624, %s35, 0
        %s626 = ssub.s32 %s34, 1
        %p627 = scmp.gt.s32.totalorder %s626, 0
        %s628 = scalar_select %p627, %s626, 0
        %s629 = ssub.s32 %s34, 1
        %p630 = scmp.gt.s32.totalorder %s629, 0
        %s631 = scalar_select %p630, %s629, 0
        %p632 = scmp.lt.s32.totalorder %s631, 1
        %s633 = scalar_select %p632, %s631, 1
        %s634 = scalar_lea.vmem %s7, %s633
        %s635 = ssub.s32 %s34, 1
        %p636 = scmp.gt.s32.totalorder %s635, 0
        %s637 = scalar_select %p636, %s635, 0
        %s638 = ssub.s32 %s34, 1
        %p639 = scmp.gt.s32.totalorder %s638, 0
        %s640 = scalar_select %p639, %s638, 0
        %s641 = ssub.s32 %s34, 1
        %p642 = scmp.gt.s32.totalorder %s641, 0
        %s643 = scalar_select %p642, %s641, 0
        %p644 = scmp.lt.s32.totalorder %s643, 1
        %s645 = scalar_select %p644, %s643, 1
        %s646 = scalar_lea.vmem %s9, %s645
        %s647 = ssub.s32 %s34, 1
        %p648 = scmp.gt.s32.totalorder %s647, 0
        %s649 = scalar_select %p648, %s647, 0
        %s651 = smul.u32 %s35, 128
        %p652 = scmp.eq.s32.totalorder %s34, 0
        // Predicated region
        $region81: #{tpu_custom_call.1} parent=67 // pred_check
          %p653 = pneg %p652
        $region82: #{tpu_custom_call.1} parent=67 // pred_check_branch
          %655 = sbr.rel (%p653) target = $region84
        $region83: #{tpu_custom_call.1} parent=67 // pred_region
          %v656 = vld [vmem:[%s615] sm:$0xff]
          %v657 = vld [vmem:[%s615 + $0x8] sm:$0xff]
          %v658 = vld [vmem:[%s615 + $0x10] sm:$0xff]
          %v659 = vld [vmem:[%s615 + $0x18] sm:$0xff]
          %v660 = vld [vmem:[%s615 + $0x20] sm:$0xff]
          %v661 = vld [vmem:[%s615 + $0x28] sm:$0xff]
          %v662 = vld [vmem:[%s615 + $0x30] sm:$0xff]
          %v663 = vld [vmem:[%s615 + $0x38] sm:$0xff]
          %v664 = vld [vmem:[%s615 + $0x40] sm:$0xff]
          %v665 = vld [vmem:[%s615 + $0x48] sm:$0xff]
          %v666 = vld [vmem:[%s615 + $0x50] sm:$0xff]
          %v667 = vld [vmem:[%s615 + $0x58] sm:$0xff]
          %v668 = vld [vmem:[%s615 + $0x60] sm:$0xff]
          %v669 = vld [vmem:[%s615 + $0x68] sm:$0xff]
          %v670 = vld [vmem:[%s615 + $0x70] sm:$0xff]
          %v671 = vld [vmem:[%s615 + $0x78] sm:$0xff]
          %v672 = vpack.c.bf16 %v657, %v656
          %v673 = vpack.c.bf16 %v659, %v658
          %v674 = vpack.c.bf16 %v661, %v660
          %v675 = vpack.c.bf16 %v663, %v662
          %v676 = vpack.c.bf16 %v665, %v664
          %v677 = vpack.c.bf16 %v667, %v666
          %v678 = vpack.c.bf16 %v669, %v668
          %v679 = vpack.c.bf16 %v671, %v670
          %v680 = vld [vmem:[%s4] sm:$0xf]
          %v681 = vld [vmem:[%s5] sm:$0x1]
          %v683 = vperm.slane %v681, 0
          %vm685 = vcmask 64512
          %v687 = vsel %vm685, %v672, 0
          %v690 = vsel %vm685, %v673, 0
          %v693 = vsel %vm685, %v674, 0
          %v696 = vsel %vm685, %v675, 0
          %v699 = vsel %vm685, %v676, 0
          %v702 = vsel %vm685, %v677, 0
          %v705 = vsel %vm685, %v678, 0
          %v708 = vsel %vm685, %v679, 0
          %vm710 = vcmask 1043456
          %v712 = vsel %vm710, %v680, 0
          %714 = vmatpush.bf16.msra.mxu0 0
          %715 = vmatpush.bf16.msra.mxu0 0
          %716 = vmatpush.bf16.msra.mxu0 0
          %717 = vmatpush.bf16.msra.mxu0 0
          %718 = vmatpush.bf16.msra.mxu0 0
          %719 = vmatpush.bf16.msra.mxu0 0
          %720 = vmatpush.bf16.msra.mxu0 0
          %721 = vmatpush.bf16.msra.mxu0 %v712
          %722 = vmatmul.bf16.gmra.mxu0 %v687
          %v723 = vpop.f32.mrf.mxu0
          %v724 = vadd.f32 %v683, %v723
          %v725 = vpop.f32.mrf.mxu0
          %v726 = vadd.f32 %v683, %v725
          %727 = vmatmul.bf16.gmra.mxu0 %v690
          %v728 = vpop.f32.mrf.mxu0
          %v729 = vadd.f32 %v683, %v728
          %v730 = vpop.f32.mrf.mxu0
          %v731 = vadd.f32 %v683, %v730
          %732 = vmatmul.bf16.gmra.mxu0 %v693
          %v733 = vpop.f32.mrf.mxu0
          %v734 = vadd.f32 %v683, %v733
          %v735 = vpop.f32.mrf.mxu0
          %v736 = vadd.f32 %v683, %v735
          %737 = vmatmul.bf16.gmra.mxu0 %v696
          %v738 = vpop.f32.mrf.mxu0
          %v739 = vadd.f32 %v683, %v738
          %v740 = vpop.f32.mrf.mxu0
          %v741 = vadd.f32 %v683, %v740
          %742 = vmatmul.bf16.gmra.mxu0 %v699
          %v743 = vpop.f32.mrf.mxu0
          %v744 = vadd.f32 %v683, %v743
          %v745 = vpop.f32.mrf.mxu0
          %v746 = vadd.f32 %v683, %v745
          %747 = vmatmul.bf16.gmra.mxu0 %v702
          %v748 = vpop.f32.mrf.mxu0
          %v749 = vadd.f32 %v683, %v748
          %v750 = vpop.f32.mrf.mxu0
          %v751 = vadd.f32 %v683, %v750
          %752 = vmatmul.bf16.gmra.mxu0 %v705
          %v753 = vpop.f32.mrf.mxu0
          %v754 = vadd.f32 %v683, %v753
          %v755 = vpop.f32.mrf.mxu0
          %v756 = vadd.f32 %v683, %v755
          %757 = vmatmul.bf16.gmra.mxu0 %v708
          %v758 = vpop.f32.mrf.mxu0
          %v759 = vadd.f32 %v683, %v758
          %v760 = vpop.f32.mrf.mxu0
          %v761 = vadd.f32 %v683, %v760
          %762 = vdwg.mxu0
          %v763 = vpack.c.bf16 %v724, %v724
          %v764 = vpack.c.bf16 %v726, %v726
          %v765 = vpack.c.bf16 %v729, %v729
          %v766 = vpack.c.bf16 %v731, %v731
          %v767 = vpack.c.bf16 %v734, %v734
          %v768 = vpack.c.bf16 %v736, %v736
          %v769 = vpack.c.bf16 %v739, %v739
          %v770 = vpack.c.bf16 %v741, %v741
          %v771 = vpack.c.bf16 %v744, %v744
          %v772 = vpack.c.bf16 %v746, %v746
          %v773 = vpack.c.bf16 %v749, %v749
          %v774 = vpack.c.bf16 %v751, %v751
          %v775 = vpack.c.bf16 %v754, %v754
          %v776 = vpack.c.bf16 %v756, %v756
          %v777 = vpack.c.bf16 %v759, %v759
          %v778 = vpack.c.bf16 %v761, %v761
          %s779 = sshra.s32 %s651, 3
          %s780 = sand.u32 %s651, 7
          %s781 = smul.addr %s779, 4
          %s782 = scalar_lea.vmem [#allocation2], %s781
          %783 = vst [vmem:[%s782] sm:$0xf] %v763
          %784 = vst [vmem:[%s782 + $0x4] sm:$0xf] %v764
          %785 = vst [vmem:[%s782 + $0x8] sm:$0xf] %v765
          %786 = vst [vmem:[%s782 + $0xc] sm:$0xf] %v766
          %787 = vst [vmem:[%s782 + $0x10] sm:$0xf] %v767
          %788 = vst [vmem:[%s782 + $0x14] sm:$0xf] %v768
          %789 = vst [vmem:[%s782 + $0x18] sm:$0xf] %v769
          %790 = vst [vmem:[%s782 + $0x1c] sm:$0xf] %v770
          %791 = vst [vmem:[%s782 + $0x20] sm:$0xf] %v771
          %792 = vst [vmem:[%s782 + $0x24] sm:$0xf] %v772
          %793 = vst [vmem:[%s782 + $0x28] sm:$0xf] %v773
          %794 = vst [vmem:[%s782 + $0x2c] sm:$0xf] %v774
          %795 = vst [vmem:[%s782 + $0x30] sm:$0xf] %v775
          %796 = vst [vmem:[%s782 + $0x34] sm:$0xf] %v776
          %797 = vst [vmem:[%s782 + $0x38] sm:$0xf] %v777
          %798 = vst [vmem:[%s782 + $0x3c] sm:$0xf] %v778
        $region84: #{tpu_custom_call.1} parent=67 // pred_fallthru
          _
        %p799 = scmp.gt.s32.totalorder %s34, 0
        // Predicated region
        $region85: #{tpu_custom_call.1} parent=67 // pred_check
          %p800 = pneg %p799
        $region86: #{tpu_custom_call.1} parent=67 // pred_check_branch
          %802 = sbr.rel (%p800) target = $region88
        $region87: #{tpu_custom_call.1} parent=67 // pred_region
          %s803 = ssub.s32 %s34, 1
          %s804 = sand.u32 %s803, 1
          %s805 = sand.u32 %s34, 1
          %s806 = sshra.s32 %s651, 3
          %s807 = sand.u32 %s651, 7
          %s808 = smul.u32 %s804, 32
          %s809 = sadd.s32 %s806, %s808
          %s810 = smul.addr %s809, 4
          %s811 = scalar_lea.vmem [#allocation2], %s810
          %v812 = vld [vmem:[%s811] sm:$0xf]
          %v813 = vld [vmem:[%s811 + $0x4] sm:$0xf]
          %v814 = vld [vmem:[%s811 + $0x8] sm:$0xf]
          %v815 = vld [vmem:[%s811 + $0xc] sm:$0xf]
          %v816 = vld [vmem:[%s811 + $0x10] sm:$0xf]
          %v817 = vld [vmem:[%s811 + $0x14] sm:$0xf]
          %v818 = vld [vmem:[%s811 + $0x18] sm:$0xf]
          %v819 = vld [vmem:[%s811 + $0x1c] sm:$0xf]
          %v820 = vld [vmem:[%s811 + $0x20] sm:$0xf]
          %v821 = vld [vmem:[%s811 + $0x24] sm:$0xf]
          %v822 = vld [vmem:[%s811 + $0x28] sm:$0xf]
          %v823 = vld [vmem:[%s811 + $0x2c] sm:$0xf]
          %v824 = vld [vmem:[%s811 + $0x30] sm:$0xf]
          %v825 = vld [vmem:[%s811 + $0x34] sm:$0xf]
          %v826 = vld [vmem:[%s811 + $0x38] sm:$0xf]
          %v827 = vld [vmem:[%s811 + $0x3c] sm:$0xf]
          %v828 = vunpack.c.l.bf16 %v812
          %v829 = vunpack.c.l.bf16 %v813
          %v830 = vunpack.c.l.bf16 %v814
          %v831 = vunpack.c.l.bf16 %v815
          %v832 = vunpack.c.l.bf16 %v816
          %v833 = vunpack.c.l.bf16 %v817
          %v834 = vunpack.c.l.bf16 %v818
          %v835 = vunpack.c.l.bf16 %v819
          %v836 = vunpack.c.l.bf16 %v820
          %v837 = vunpack.c.l.bf16 %v821
          %v838 = vunpack.c.l.bf16 %v822
          %v839 = vunpack.c.l.bf16 %v823
          %v840 = vunpack.c.l.bf16 %v824
          %v841 = vunpack.c.l.bf16 %v825
          %v842 = vunpack.c.l.bf16 %v826
          %v843 = vunpack.c.l.bf16 %v827
          %s844 = smul.u32 %s806, 2
          %s845 = smul.addr %s844, 4
          %s846 = scalar_lea.vmem %s1, %s845
          %v847 = vld [vmem:[%s846] sm:$0xff]
          %v848 = vld [vmem:[%s846 + $0x8] sm:$0xff]
          %v849 = vld [vmem:[%s846 + $0x10] sm:$0xff]
          %v850 = vld [vmem:[%s846 + $0x18] sm:$0xff]
          %v851 = vld [vmem:[%s846 + $0x20] sm:$0xff]
          %v852 = vld [vmem:[%s846 + $0x28] sm:$0xff]
          %v853 = vld [vmem:[%s846 + $0x30] sm:$0xff]
          %v854 = vld [vmem:[%s846 + $0x38] sm:$0xff]
          %v855 = vld [vmem:[%s846 + $0x40] sm:$0xff]
          %v856 = vld [vmem:[%s846 + $0x48] sm:$0xff]
          %v857 = vld [vmem:[%s846 + $0x50] sm:$0xff]
          %v858 = vld [vmem:[%s846 + $0x58] sm:$0xff]
          %v859 = vld [vmem:[%s846 + $0x60] sm:$0xff]
          %v860 = vld [vmem:[%s846 + $0x68] sm:$0xff]
          %v861 = vld [vmem:[%s846 + $0x70] sm:$0xff]
          %v862 = vld [vmem:[%s846 + $0x78] sm:$0xff]
          %s863 = smul.addr %s808, 4
          %s864 = scalar_lea.vmem [#allocation2], %s863
          %v865 = vld [vmem:[%s864] sm:$0xf]
          %v866 = vld [vmem:[%s864 + $0x4] sm:$0xf]
          %v867 = vld [vmem:[%s864 + $0x8] sm:$0xf]
          %v868 = vld [vmem:[%s864 + $0xc] sm:$0xf]
          %v869 = vld [vmem:[%s864 + $0x10] sm:$0xf]
          %v870 = vld [vmem:[%s864 + $0x14] sm:$0xf]
          %v871 = vld [vmem:[%s864 + $0x18] sm:$0xf]
          %v872 = vld [vmem:[%s864 + $0x1c] sm:$0xf]
          %v873 = vld [vmem:[%s864 + $0x20] sm:$0xf]
          %v874 = vld [vmem:[%s864 + $0x24] sm:$0xf]
          %v875 = vld [vmem:[%s864 + $0x28] sm:$0xf]
          %v876 = vld [vmem:[%s864 + $0x2c] sm:$0xf]
          %v877 = vld [vmem:[%s864 + $0x30] sm:$0xf]
          %v878 = vld [vmem:[%s864 + $0x34] sm:$0xf]
          %v879 = vld [vmem:[%s864 + $0x38] sm:$0xf]
          %v880 = vld [vmem:[%s864 + $0x3c] sm:$0xf]
          %v881 = vld [vmem:[%s864 + $0x40] sm:$0xf]
          %v882 = vld [vmem:[%s864 + $0x44] sm:$0xf]
          %v883 = vld [vmem:[%s864 + $0x48] sm:$0xf]
          %v884 = vld [vmem:[%s864 + $0x4c] sm:$0xf]
          %v885 = vld [vmem:[%s864 + $0x50] sm:$0xf]
          %v886 = vld [vmem:[%s864 + $0x54] sm:$0xf]
          %v887 = vld [vmem:[%s864 + $0x58] sm:$0xf]
          %v888 = vld [vmem:[%s864 + $0x5c] sm:$0xf]
          %v889 = vld [vmem:[%s864 + $0x60] sm:$0xf]
          %v890 = vld [vmem:[%s864 + $0x64] sm:$0xf]
          %v891 = vld [vmem:[%s864 + $0x68] sm:$0xf]
          %v892 = vld [vmem:[%s864 + $0x6c] sm:$0xf]
          %v893 = vld [vmem:[%s864 + $0x70] sm:$0xf]
          %v894 = vld [vmem:[%s864 + $0x74] sm:$0xf]
          %v895 = vld [vmem:[%s864 + $0x78] sm:$0xf]
          %v896 = vld [vmem:[%s864 + $0x7c] sm:$0xf]
          %v913 = vunpack.c.l.b16 %v847
          %v914 = vunpack.c.h.b16 %v847
          %v915 = vunpack.c.l.b16 %v848
          %v916 = vunpack.c.h.b16 %v848
          %v917 = vunpack.c.l.b16 %v849
          %v918 = vunpack.c.h.b16 %v849
          %v919 = vunpack.c.l.b16 %v850
          %v920 = vunpack.c.h.b16 %v850
          %v921 = vunpack.c.l.b16 %v851
          %v922 = vunpack.c.h.b16 %v851
          %v923 = vunpack.c.l.b16 %v852
          %v924 = vunpack.c.h.b16 %v852
          %v925 = vunpack.c.l.b16 %v853
          %v926 = vunpack.c.h.b16 %v853
          %v927 = vunpack.c.l.b16 %v854
          %v928 = vunpack.c.h.b16 %v854
          %v929 = vunpack.c.l.b16 %v855
          %v930 = vunpack.c.h.b16 %v855
          %v931 = vunpack.c.l.b16 %v856
          %v932 = vunpack.c.h.b16 %v856
          %v933 = vunpack.c.l.b16 %v857
          %v934 = vunpack.c.h.b16 %v857
          %v935 = vunpack.c.l.b16 %v858
          %v936 = vunpack.c.h.b16 %v858
          %v937 = vunpack.c.l.b16 %v859
          %v938 = vunpack.c.h.b16 %v859
          %v939 = vunpack.c.l.b16 %v860
          %v940 = vunpack.c.h.b16 %v860
          %v941 = vunpack.c.l.b16 %v861
          %v942 = vunpack.c.h.b16 %v861
          %v943 = vunpack.c.l.b16 %v862
          %v944 = vunpack.c.h.b16 %v862
          %v945 = vpack.c.b16 %v915, %v913
          %v946 = vpack.c.b16 %v916, %v914
          %v947 = vpack.c.b16 %v919, %v917
          %v948 = vpack.c.b16 %v920, %v918
          %v949 = vpack.c.b16 %v923, %v921
          %v950 = vpack.c.b16 %v924, %v922
          %v951 = vpack.c.b16 %v927, %v925
          %v952 = vpack.c.b16 %v928, %v926
          %v953 = vpack.c.b16 %v931, %v929
          %v954 = vpack.c.b16 %v932, %v930
          %v955 = vpack.c.b16 %v935, %v933
          %v956 = vpack.c.b16 %v936, %v934
          %v957 = vpack.c.b16 %v939, %v937
          %v958 = vpack.c.b16 %v940, %v938
          %v959 = vpack.c.b16 %v943, %v941
          %v960 = vpack.c.b16 %v944, %v942
          %v1009 = vunpack.c.l.b16 %v865
          %v1010 = vunpack.c.l.b16 %v866
          %v1011 = vunpack.c.l.b16 %v867
          %v1012 = vunpack.c.l.b16 %v868
          %v1013 = vunpack.c.l.b16 %v869
          %v1014 = vunpack.c.l.b16 %v870
          %v1015 = vunpack.c.l.b16 %v871
          %v1016 = vunpack.c.l.b16 %v872
          %v1017 = vunpack.c.l.b16 %v873
          %v1018 = vunpack.c.l.b16 %v874
          %v1019 = vunpack.c.l.b16 %v875
          %v1020 = vunpack.c.l.b16 %v876
          %v1021 = vunpack.c.l.b16 %v877
          %v1022 = vunpack.c.l.b16 %v878
          %v1023 = vunpack.c.l.b16 %v879
          %v1024 = vunpack.c.l.b16 %v880
          %v1025 = vunpack.c.l.b16 %v881
          %v1026 = vunpack.c.l.b16 %v882
          %v1027 = vunpack.c.l.b16 %v883
          %v1028 = vunpack.c.l.b16 %v884
          %v1029 = vunpack.c.l.b16 %v885
          %v1030 = vunpack.c.l.b16 %v886
          %v1031 = vunpack.c.l.b16 %v887
          %v1032 = vunpack.c.l.b16 %v888
          %v1033 = vunpack.c.l.b16 %v889
          %v1034 = vunpack.c.l.b16 %v890
          %v1035 = vunpack.c.l.b16 %v891
          %v1036 = vunpack.c.l.b16 %v892
          %v1037 = vunpack.c.l.b16 %v893
          %v1038 = vunpack.c.l.b16 %v894
          %v1039 = vunpack.c.l.b16 %v895
          %v1040 = vunpack.c.l.b16 %v896
          %v1041 = vpack.c.b16 %v1010, %v1009
          %v1042 = vpack.c.b16 %v1012, %v1011
          %v1043 = vpack.c.b16 %v1014, %v1013
          %v1044 = vpack.c.b16 %v1016, %v1015
          %v1045 = vpack.c.b16 %v1018, %v1017
          %v1046 = vpack.c.b16 %v1020, %v1019
          %v1047 = vpack.c.b16 %v1022, %v1021
          %v1048 = vpack.c.b16 %v1024, %v1023
          %v1049 = vpack.c.b16 %v1026, %v1025
          %v1050 = vpack.c.b16 %v1028, %v1027
          %v1051 = vpack.c.b16 %v1030, %v1029
          %v1052 = vpack.c.b16 %v1032, %v1031
          %v1053 = vpack.c.b16 %v1034, %v1033
          %v1054 = vpack.c.b16 %v1036, %v1035
          %v1055 = vpack.c.b16 %v1038, %v1037
          %v1056 = vpack.c.b16 %v1040, %v1039
          %1073 = vmatpush.bf16.msra.mxu0 %v1048
          %1074 = vmatpush.bf16.msra.mxu0 %v1047
          %1075 = vmatpush.bf16.msra.mxu0 %v1046
          %1076 = vmatpush.bf16.msra.mxu0 %v1045
          %1077 = vmatpush.bf16.msra.mxu0 %v1044
          %1078 = vmatpush.bf16.msra.mxu0 %v1043
          %1079 = vmatpush.bf16.msra.mxu0 %v1042
          %1080 = vmatpush.bf16.msra.mxu0 %v1041
          %1081 = vmatmul.bf16.gmra.mxu0 %v945
          %v1082 = vpop.f32.mrf.mxu0
          %v1083 = vadd.f32 0.0, %v1082
          %v1084 = vpop.f32.mrf.mxu0
          %v1085 = vadd.f32 0.0, %v1084
          %1086 = vmatmul.bf16.gmra.mxu0 %v947
          %v1087 = vpop.f32.mrf.mxu0
          %v1088 = vadd.f32 0.0, %v1087
          %v1089 = vpop.f32.mrf.mxu0
          %v1090 = vadd.f32 0.0, %v1089
          %1091 = vmatmul.bf16.gmra.mxu0 %v949
          %v1092 = vpop.f32.mrf.mxu0
          %v1093 = vadd.f32 0.0, %v1092
          %v1094 = vpop.f32.mrf.mxu0
          %v1095 = vadd.f32 0.0, %v1094
          %1096 = vmatmul.bf16.gmra.mxu0 %v951
          %v1097 = vpop.f32.mrf.mxu0
          %v1098 = vadd.f32 0.0, %v1097
          %v1099 = vpop.f32.mrf.mxu0
          %v1100 = vadd.f32 0.0, %v1099
          %1101 = vmatmul.bf16.gmra.mxu0 %v953
          %v1102 = vpop.f32.mrf.mxu0
          %v1103 = vadd.f32 0.0, %v1102
          %v1104 = vpop.f32.mrf.mxu0
          %v1105 = vadd.f32 0.0, %v1104
          %1106 = vmatmul.bf16.gmra.mxu0 %v955
          %v1107 = vpop.f32.mrf.mxu0
          %v1108 = vadd.f32 0.0, %v1107
          %v1109 = vpop.f32.mrf.mxu0
          %v1110 = vadd.f32 0.0, %v1109
          %1111 = vmatmul.bf16.gmra.mxu0 %v957
          %v1112 = vpop.f32.mrf.mxu0
          %v1113 = vadd.f32 0.0, %v1112
          %v1114 = vpop.f32.mrf.mxu0
          %v1115 = vadd.f32 0.0, %v1114
          %1116 = vmatmul.bf16.gmra.mxu0 %v959
          %v1117 = vpop.f32.mrf.mxu0
          %v1118 = vadd.f32 0.0, %v1117
          %v1119 = vpop.f32.mrf.mxu0
          %v1120 = vadd.f32 0.0, %v1119
          %1121 = vdwg.mxu0
          %1122 = vmatpush.bf16.msra.mxu0 %v1056
          %1123 = vmatpush.bf16.msra.mxu0 %v1055
          %1124 = vmatpush.bf16.msra.mxu0 %v1054
          %1125 = vmatpush.bf16.msra.mxu0 %v1053
          %1126 = vmatpush.bf16.msra.mxu0 %v1052
          %1127 = vmatpush.bf16.msra.mxu0 %v1051
          %1128 = vmatpush.bf16.msra.mxu0 %v1050
          %1129 = vmatpush.bf16.msra.mxu0 %v1049
          %1130 = vmatmul.bf16.gmra.mxu0 %v946
          %v1131 = vpop.f32.mrf.mxu0
          %v1132 = vadd.f32 %v1083, %v1131
          %v1133 = vpop.f32.mrf.mxu0
          %v1134 = vadd.f32 %v1085, %v1133
          %1135 = vmatmul.bf16.gmra.mxu0 %v948
          %v1136 = vpop.f32.mrf.mxu0
          %v1137 = vadd.f32 %v1088, %v1136
          %v1138 = vpop.f32.mrf.mxu0
          %v1139 = vadd.f32 %v1090, %v1138
          %1140 = vmatmul.bf16.gmra.mxu0 %v950
          %v1141 = vpop.f32.mrf.mxu0
          %v1142 = vadd.f32 %v1093, %v1141
          %v1143 = vpop.f32.mrf.mxu0
          %v1144 = vadd.f32 %v1095, %v1143
          %1145 = vmatmul.bf16.gmra.mxu0 %v952
          %v1146 = vpop.f32.mrf.mxu0
          %v1147 = vadd.f32 %v1098, %v1146
          %v1148 = vpop.f32.mrf.mxu0
          %v1149 = vadd.f32 %v1100, %v1148
          %1150 = vmatmul.bf16.gmra.mxu0 %v954
          %v1151 = vpop.f32.mrf.mxu0
          %v1152 = vadd.f32 %v1103, %v1151
          %v1153 = vpop.f32.mrf.mxu0
          %v1154 = vadd.f32 %v1105, %v1153
          %1155 = vmatmul.bf16.gmra.mxu0 %v956
          %v1156 = vpop.f32.mrf.mxu0
          %v1157 = vadd.f32 %v1108, %v1156
          %v1158 = vpop.f32.mrf.mxu0
          %v1159 = vadd.f32 %v1110, %v1158
          %1160 = vmatmul.bf16.gmra.mxu0 %v958
          %v1161 = vpop.f32.mrf.mxu0
          %v1162 = vadd.f32 %v1113, %v1161
          %v1163 = vpop.f32.mrf.mxu0
          %v1164 = vadd.f32 %v1115, %v1163
          %1165 = vmatmul.bf16.gmra.mxu0 %v960
          %v1166 = vpop.f32.mrf.mxu0
          %v1167 = vadd.f32 %v1118, %v1166
          %v1168 = vpop.f32.mrf.mxu0
          %v1169 = vadd.f32 %v1120, %v1168
          %1170 = vdwg.mxu0
          %v1171 = vadd.f32 %v828, %v1132
          %v1172 = vadd.f32 %v829, %v1134
          %v1173 = vadd.f32 %v830, %v1137
          %v1174 = vadd.f32 %v831, %v1139
          %v1175 = vadd.f32 %v832, %v1142
          %v1176 = vadd.f32 %v833, %v1144
          %v1177 = vadd.f32 %v834, %v1147
          %v1178 = vadd.f32 %v835, %v1149
          %v1179 = vadd.f32 %v836, %v1152
          %v1180 = vadd.f32 %v837, %v1154
          %v1181 = vadd.f32 %v838, %v1157
          %v1182 = vadd.f32 %v839, %v1159
          %v1183 = vadd.f32 %v840, %v1162
          %v1184 = vadd.f32 %v841, %v1164
          %v1185 = vadd.f32 %v842, %v1167
          %v1186 = vadd.f32 %v843, %v1169
          %v1187 = vpack.c.bf16 %v1172, %v1171
          %v1188 = vpack.c.bf16 %v1174, %v1173
          %v1189 = vpack.c.bf16 %v1176, %v1175
          %v1190 = vpack.c.bf16 %v1178, %v1177
          %v1191 = vpack.c.bf16 %v1180, %v1179
          %v1192 = vpack.c.bf16 %v1182, %v1181
          %v1193 = vpack.c.bf16 %v1184, %v1183
          %v1194 = vpack.c.bf16 %v1186, %v1185
          %v1195 = vld [vmem:[%s528] sm:$0xf]
          %v1196 = vld [vmem:[%s528 + $0x4] sm:$0xf]
          %v1197 = vld [vmem:[%s528 + $0x8] sm:$0xf]
          %v1198 = vld [vmem:[%s528 + $0xc] sm:$0xf]
          %v1199 = vld [vmem:[%s528 + $0x10] sm:$0xf]
          %v1200 = vld [vmem:[%s528 + $0x14] sm:$0xf]
          %v1201 = vld [vmem:[%s528 + $0x18] sm:$0xf]
          %v1202 = vld [vmem:[%s528 + $0x1c] sm:$0xf]
          %v1203 = vld [vmem:[%s528 + $0x20] sm:$0xf]
          %v1204 = vld [vmem:[%s528 + $0x24] sm:$0xf]
          %v1205 = vld [vmem:[%s528 + $0x28] sm:$0xf]
          %v1206 = vld [vmem:[%s528 + $0x2c] sm:$0xf]
          %v1207 = vld [vmem:[%s528 + $0x30] sm:$0xf]
          %v1208 = vld [vmem:[%s528 + $0x34] sm:$0xf]
          %v1209 = vld [vmem:[%s528 + $0x38] sm:$0xf]
          %v1210 = vld [vmem:[%s528 + $0x3c] sm:$0xf]
          %v1211 = vld [vmem:[%s634] sm:$0x1]
          %v1213 = vperm.slane %v1211, 0
          %v1231 = vunpack.c.l.b16 %v1195
          %v1232 = vunpack.c.l.b16 %v1196
          %v1233 = vunpack.c.l.b16 %v1197
          %v1234 = vunpack.c.l.b16 %v1198
          %v1235 = vunpack.c.l.b16 %v1199
          %v1236 = vunpack.c.l.b16 %v1200
          %v1237 = vunpack.c.l.b16 %v1201
          %v1238 = vunpack.c.l.b16 %v1202
          %v1239 = vunpack.c.l.b16 %v1203
          %v1240 = vunpack.c.l.b16 %v1204
          %v1241 = vunpack.c.l.b16 %v1205
          %v1242 = vunpack.c.l.b16 %v1206
          %v1243 = vunpack.c.l.b16 %v1207
          %v1244 = vunpack.c.l.b16 %v1208
          %v1245 = vunpack.c.l.b16 %v1209
          %v1246 = vunpack.c.l.b16 %v1210
          %v1247 = vpack.c.b16 %v1232, %v1231
          %v1248 = vpack.c.b16 %v1234, %v1233
          %v1249 = vpack.c.b16 %v1236, %v1235
          %v1250 = vpack.c.b16 %v1238, %v1237
          %v1251 = vpack.c.b16 %v1240, %v1239
          %v1252 = vpack.c.b16 %v1242, %v1241
          %v1253 = vpack.c.b16 %v1244, %v1243
          %v1254 = vpack.c.b16 %v1246, %v1245
          %1263 = vmatpush.bf16.msra.mxu0 %v1254
          %1264 = vmatpush.bf16.msra.mxu0 %v1253
          %1265 = vmatpush.bf16.msra.mxu0 %v1252
          %1266 = vmatpush.bf16.msra.mxu0 %v1251
          %1267 = vmatpush.bf16.msra.mxu0 %v1250
          %1268 = vmatpush.bf16.msra.mxu0 %v1249
          %1269 = vmatpush.bf16.msra.mxu0 %v1248
          %1270 = vmatpush.bf16.msra.mxu0 %v1247
          %1271 = vmatmul.bf16.gmra.mxu0 %v1187
          %v1272 = vpop.f32.mrf.mxu0
          %v1273 = vadd.f32 %v1213, %v1272
          %v1274 = vpop.f32.mrf.mxu0
          %v1275 = vadd.f32 %v1213, %v1274
          %1276 = vmatmul.bf16.gmra.mxu0 %v1188
          %v1277 = vpop.f32.mrf.mxu0
          %v1278 = vadd.f32 %v1213, %v1277
          %v1279 = vpop.f32.mrf.mxu0
          %v1280 = vadd.f32 %v1213, %v1279
          %1281 = vmatmul.bf16.gmra.mxu0 %v1189
          %v1282 = vpop.f32.mrf.mxu0
          %v1283 = vadd.f32 %v1213, %v1282
          %v1284 = vpop.f32.mrf.mxu0
          %v1285 = vadd.f32 %v1213, %v1284
          %1286 = vmatmul.bf16.gmra.mxu0 %v1190
          %v1287 = vpop.f32.mrf.mxu0
          %v1288 = vadd.f32 %v1213, %v1287
          %v1289 = vpop.f32.mrf.mxu0
          %v1290 = vadd.f32 %v1213, %v1289
          %1291 = vmatmul.bf16.gmra.mxu0 %v1191
          %v1292 = vpop.f32.mrf.mxu0
          %v1293 = vadd.f32 %v1213, %v1292
          %v1294 = vpop.f32.mrf.mxu0
          %v1295 = vadd.f32 %v1213, %v1294
          %1296 = vmatmul.bf16.gmra.mxu0 %v1192
          %v1297 = vpop.f32.mrf.mxu0
          %v1298 = vadd.f32 %v1213, %v1297
          %v1299 = vpop.f32.mrf.mxu0
          %v1300 = vadd.f32 %v1213, %v1299
          %1301 = vmatmul.bf16.gmra.mxu0 %v1193
          %v1302 = vpop.f32.mrf.mxu0
          %v1303 = vadd.f32 %v1213, %v1302
          %v1304 = vpop.f32.mrf.mxu0
          %v1305 = vadd.f32 %v1213, %v1304
          %1306 = vmatmul.bf16.gmra.mxu0 %v1194
          %v1307 = vpop.f32.mrf.mxu0
          %v1308 = vadd.f32 %v1213, %v1307
          %v1309 = vpop.f32.mrf.mxu0
          %v1310 = vadd.f32 %v1213, %v1309
          %1311 = vdwg.mxu0
          %v1312 = vmax.f32 %v1273, 0.0
          %v1313 = vmax.f32 %v1275, 0.0
          %v1314 = vmax.f32 %v1278, 0.0
          %v1315 = vmax.f32 %v1280, 0.0
          %v1316 = vmax.f32 %v1283, 0.0
          %v1317 = vmax.f32 %v1285, 0.0
          %v1318 = vmax.f32 %v1288, 0.0
          %v1319 = vmax.f32 %v1290, 0.0
          %v1320 = vmax.f32 %v1293, 0.0
          %v1321 = vmax.f32 %v1295, 0.0
          %v1322 = vmax.f32 %v1298, 0.0
          %v1323 = vmax.f32 %v1300, 0.0
          %v1324 = vmax.f32 %v1303, 0.0
          %v1325 = vmax.f32 %v1305, 0.0
          %v1326 = vmax.f32 %v1308, 0.0
          %v1327 = vmax.f32 %v1310, 0.0
          %v1328 = vpack.c.bf16 %v1313, %v1312
          %v1329 = vpack.c.bf16 %v1315, %v1314
          %v1330 = vpack.c.bf16 %v1317, %v1316
          %v1331 = vpack.c.bf16 %v1319, %v1318
          %v1332 = vpack.c.bf16 %v1321, %v1320
          %v1333 = vpack.c.bf16 %v1323, %v1322
          %v1334 = vpack.c.bf16 %v1325, %v1324
          %v1335 = vpack.c.bf16 %v1327, %v1326
          %v1336 = vld [vmem:[%s538] sm:$0xf]
          %v1337 = vld [vmem:[%s538 + $0x4] sm:$0xf]
          %v1338 = vld [vmem:[%s538 + $0x8] sm:$0xf]
          %v1339 = vld [vmem:[%s538 + $0xc] sm:$0xf]
          %v1340 = vld [vmem:[%s538 + $0x10] sm:$0xf]
          %v1341 = vld [vmem:[%s538 + $0x14] sm:$0xf]
          %v1342 = vld [vmem:[%s538 + $0x18] sm:$0xf]
          %v1343 = vld [vmem:[%s538 + $0x1c] sm:$0xf]
          %v1344 = vld [vmem:[%s538 + $0x20] sm:$0xf]
          %v1345 = vld [vmem:[%s538 + $0x24] sm:$0xf]
          %v1346 = vld [vmem:[%s538 + $0x28] sm:$0xf]
          %v1347 = vld [vmem:[%s538 + $0x2c] sm:$0xf]
          %v1348 = vld [vmem:[%s538 + $0x30] sm:$0xf]
          %v1349 = vld [vmem:[%s538 + $0x34] sm:$0xf]
          %v1350 = vld [vmem:[%s538 + $0x38] sm:$0xf]
          %v1351 = vld [vmem:[%s538 + $0x3c] sm:$0xf]
          %v1352 = vld [vmem:[%s646] sm:$0x1]
          %v1354 = vperm.slane %v1352, 0
          %v1372 = vunpack.c.l.b16 %v1336
          %v1373 = vunpack.c.l.b16 %v1337
          %v1374 = vunpack.c.l.b16 %v1338
          %v1375 = vunpack.c.l.b16 %v1339
          %v1376 = vunpack.c.l.b16 %v1340
          %v1377 = vunpack.c.l.b16 %v1341
          %v1378 = vunpack.c.l.b16 %v1342
          %v1379 = vunpack.c.l.b16 %v1343
          %v1380 = vunpack.c.l.b16 %v1344
          %v1381 = vunpack.c.l.b16 %v1345
          %v1382 = vunpack.c.l.b16 %v1346
          %v1383 = vunpack.c.l.b16 %v1347
          %v1384 = vunpack.c.l.b16 %v1348
          %v1385 = vunpack.c.l.b16 %v1349
          %v1386 = vunpack.c.l.b16 %v1350
          %v1387 = vunpack.c.l.b16 %v1351
          %v1388 = vpack.c.b16 %v1373, %v1372
          %v1389 = vpack.c.b16 %v1375, %v1374
          %v1390 = vpack.c.b16 %v1377, %v1376
          %v1391 = vpack.c.b16 %v1379, %v1378
          %v1392 = vpack.c.b16 %v1381, %v1380
          %v1393 = vpack.c.b16 %v1383, %v1382
          %v1394 = vpack.c.b16 %v1385, %v1384
          %v1395 = vpack.c.b16 %v1387, %v1386
          %1404 = vmatpush.bf16.msra.mxu0 %v1395
          %1405 = vmatpush.bf16.msra.mxu0 %v1394
          %1406 = vmatpush.bf16.msra.mxu0 %v1393
          %1407 = vmatpush.bf16.msra.mxu0 %v1392
          %1408 = vmatpush.bf16.msra.mxu0 %v1391
          %1409 = vmatpush.bf16.msra.mxu0 %v1390
          %1410 = vmatpush.bf16.msra.mxu0 %v1389
          %1411 = vmatpush.bf16.msra.mxu0 %v1388
          %1412 = vmatmul.bf16.gmra.mxu0 %v1328
          %v1413 = vpop.f32.mrf.mxu0
          %v1414 = vadd.f32 %v1354, %v1413
          %v1415 = vpop.f32.mrf.mxu0
          %v1416 = vadd.f32 %v1354, %v1415
          %1417 = vmatmul.bf16.gmra.mxu0 %v1329
          %v1418 = vpop.f32.mrf.mxu0
          %v1419 = vadd.f32 %v1354, %v1418
          %v1420 = vpop.f32.mrf.mxu0
          %v1421 = vadd.f32 %v1354, %v1420
          %1422 = vmatmul.bf16.gmra.mxu0 %v1330
          %v1423 = vpop.f32.mrf.mxu0
          %v1424 = vadd.f32 %v1354, %v1423
          %v1425 = vpop.f32.mrf.mxu0
          %v1426 = vadd.f32 %v1354, %v1425
          %1427 = vmatmul.bf16.gmra.mxu0 %v1331
          %v1428 = vpop.f32.mrf.mxu0
          %v1429 = vadd.f32 %v1354, %v1428
          %v1430 = vpop.f32.mrf.mxu0
          %v1431 = vadd.f32 %v1354, %v1430
          %1432 = vmatmul.bf16.gmra.mxu0 %v1332
          %v1433 = vpop.f32.mrf.mxu0
          %v1434 = vadd.f32 %v1354, %v1433
          %v1435 = vpop.f32.mrf.mxu0
          %v1436 = vadd.f32 %v1354, %v1435
          %1437 = vmatmul.bf16.gmra.mxu0 %v1333
          %v1438 = vpop.f32.mrf.mxu0
          %v1439 = vadd.f32 %v1354, %v1438
          %v1440 = vpop.f32.mrf.mxu0
          %v1441 = vadd.f32 %v1354, %v1440
          %1442 = vmatmul.bf16.gmra.mxu0 %v1334
          %v1443 = vpop.f32.mrf.mxu0
          %v1444 = vadd.f32 %v1354, %v1443
          %v1445 = vpop.f32.mrf.mxu0
          %v1446 = vadd.f32 %v1354, %v1445
          %1447 = vmatmul.bf16.gmra.mxu0 %v1335
          %v1448 = vpop.f32.mrf.mxu0
          %v1449 = vadd.f32 %v1354, %v1448
          %v1450 = vpop.f32.mrf.mxu0
          %v1451 = vadd.f32 %v1354, %v1450
          %1452 = vdwg.mxu0
          %v1453 = vmax.f32 %v1414, 0.0
          %v1454 = vmax.f32 %v1416, 0.0
          %v1455 = vmax.f32 %v1419, 0.0
          %v1456 = vmax.f32 %v1421, 0.0
          %v1457 = vmax.f32 %v1424, 0.0
          %v1458 = vmax.f32 %v1426, 0.0
          %v1459 = vmax.f32 %v1429, 0.0
          %v1460 = vmax.f32 %v1431, 0.0
          %v1461 = vmax.f32 %v1434, 0.0
          %v1462 = vmax.f32 %v1436, 0.0
          %v1463 = vmax.f32 %v1439, 0.0
          %v1464 = vmax.f32 %v1441, 0.0
          %v1465 = vmax.f32 %v1444, 0.0
          %v1466 = vmax.f32 %v1446, 0.0
          %v1467 = vmax.f32 %v1449, 0.0
          %v1468 = vmax.f32 %v1451, 0.0
          %v1469 = vadd.f32 %v1453, %v828
          %v1470 = vadd.f32 %v1454, %v829
          %v1471 = vadd.f32 %v1455, %v830
          %v1472 = vadd.f32 %v1456, %v831
          %v1473 = vadd.f32 %v1457, %v832
          %v1474 = vadd.f32 %v1458, %v833
          %v1475 = vadd.f32 %v1459, %v834
          %v1476 = vadd.f32 %v1460, %v835
          %v1477 = vadd.f32 %v1461, %v836
          %v1478 = vadd.f32 %v1462, %v837
          %v1479 = vadd.f32 %v1463, %v838
          %v1480 = vadd.f32 %v1464, %v839
          %v1481 = vadd.f32 %v1465, %v840
          %v1482 = vadd.f32 %v1466, %v841
          %v1483 = vadd.f32 %v1467, %v842
          %v1484 = vadd.f32 %v1468, %v843
          %v1485 = vpack.c.bf16 %v1469, %v1469
          %v1486 = vpack.c.bf16 %v1470, %v1470
          %v1487 = vpack.c.bf16 %v1471, %v1471
          %v1488 = vpack.c.bf16 %v1472, %v1472
          %v1489 = vpack.c.bf16 %v1473, %v1473
          %v1490 = vpack.c.bf16 %v1474, %v1474
          %v1491 = vpack.c.bf16 %v1475, %v1475
          %v1492 = vpack.c.bf16 %v1476, %v1476
          %v1493 = vpack.c.bf16 %v1477, %v1477
          %v1494 = vpack.c.bf16 %v1478, %v1478
          %v1495 = vpack.c.bf16 %v1479, %v1479
          %v1496 = vpack.c.bf16 %v1480, %v1480
          %v1497 = vpack.c.bf16 %v1481, %v1481
          %v1498 = vpack.c.bf16 %v1482, %v1482
          %v1499 = vpack.c.bf16 %v1483, %v1483
          %v1500 = vpack.c.bf16 %v1484, %v1484
          %p1501 = scmp.lt.s32.totalorder %s34, 2
          // Predicated region
          $region89: #{tpu_custom_call.1} parent=87 // pred_check
            %p1502 = pneg %p1501
          $region90: #{tpu_custom_call.1} parent=87 // pred_check_branch
            %1504 = sbr.rel (%p1502) target = $region92
          $region91: #{tpu_custom_call.1} parent=87 // pred_region
            %s1505 = smul.u32 %s805, 32
            %s1506 = sadd.s32 %s806, %s1505
            %s1507 = smul.addr %s1506, 4
            %s1508 = scalar_lea.vmem [#allocation2], %s1507
            %1509 = vst [vmem:[%s1508] sm:$0xf] %v1485
            %1510 = vst [vmem:[%s1508 + $0x4] sm:$0xf] %v1486
            %1511 = vst [vmem:[%s1508 + $0x8] sm:$0xf] %v1487
            %1512 = vst [vmem:[%s1508 + $0xc] sm:$0xf] %v1488
            %1513 = vst [vmem:[%s1508 + $0x10] sm:$0xf] %v1489
            %1514 = vst [vmem:[%s1508 + $0x14] sm:$0xf] %v1490
            %1515 = vst [vmem:[%s1508 + $0x18] sm:$0xf] %v1491
            %1516 = vst [vmem:[%s1508 + $0x1c] sm:$0xf] %v1492
            %1517 = vst [vmem:[%s1508 + $0x20] sm:$0xf] %v1493
            %1518 = vst [vmem:[%s1508 + $0x24] sm:$0xf] %v1494
            %1519 = vst [vmem:[%s1508 + $0x28] sm:$0xf] %v1495
            %1520 = vst [vmem:[%s1508 + $0x2c] sm:$0xf] %v1496
            %1521 = vst [vmem:[%s1508 + $0x30] sm:$0xf] %v1497
            %1522 = vst [vmem:[%s1508 + $0x34] sm:$0xf] %v1498
            %1523 = vst [vmem:[%s1508 + $0x38] sm:$0xf] %v1499
            %1524 = vst [vmem:[%s1508 + $0x3c] sm:$0xf] %v1500
          $region92: #{tpu_custom_call.1} parent=87 // pred_fallthru
            _
          %p1525 = scmp.eq.s32.totalorder %s34, 2
          // Predicated region
          $region93: #{tpu_custom_call.1} parent=87 // pred_check
            %p1526 = pneg %p1525
          $region94: #{tpu_custom_call.1} parent=87 // pred_check_branch
            %1528 = sbr.rel (%p1526) target = $region96
          $region95: #{tpu_custom_call.1} parent=87 // pred_region
            %p1529 = scmp.eq.s32.totalorder %s35, 0
            // Predicated region
            $region97: #{tpu_custom_call.1} parent=95 // pred_check
              %p1530 = pneg %p1529
            $region98: #{tpu_custom_call.1} parent=95 // pred_check_branch
              %1532 = sbr.rel (%p1530) target = $region100
            $region99: #{tpu_custom_call.1} parent=95 // pred_region
              %1533 = vst [vmem:[#allocation3] sm:$0x3] 0.0
            $region100: #{tpu_custom_call.1} parent=95 // pred_fallthru
              _
            %v1534 = vld [vmem:[#allocation3] sm:$0x3]
            %v1535 = vld [vmem:[%s623] sm:$0x1]
            %v1552 = vunpack.c.l.b16 %v1485
            %v1553 = vunpack.c.l.b16 %v1486
            %v1554 = vunpack.c.l.b16 %v1487
            %v1555 = vunpack.c.l.b16 %v1488
            %v1556 = vunpack.c.l.b16 %v1489
            %v1557 = vunpack.c.l.b16 %v1490
            %v1558 = vunpack.c.l.b16 %v1491
            %v1559 = vunpack.c.l.b16 %v1492
            %v1560 = vunpack.c.l.b16 %v1493
            %v1561 = vunpack.c.l.b16 %v1494
            %v1562 = vunpack.c.l.b16 %v1495
            %v1563 = vunpack.c.l.b16 %v1496
            %v1564 = vunpack.c.l.b16 %v1497
            %v1565 = vunpack.c.l.b16 %v1498
            %v1566 = vunpack.c.l.b16 %v1499
            %v1567 = vunpack.c.l.b16 %v1500
            %v1568 = vpack.c.b16 %v1553, %v1552
            %v1569 = vpack.c.b16 %v1555, %v1554
            %v1570 = vpack.c.b16 %v1557, %v1556
            %v1571 = vpack.c.b16 %v1559, %v1558
            %v1572 = vpack.c.b16 %v1561, %v1560
            %v1573 = vpack.c.b16 %v1563, %v1562
            %v1574 = vpack.c.b16 %v1565, %v1564
            %v1575 = vpack.c.b16 %v1567, %v1566
            %1584 = vmatpush.bf16.msra.mxu0 %v1575
            %1585 = vmatpush.bf16.msra.mxu0 %v1574
            %1586 = vmatpush.bf16.msra.mxu0 %v1573
            %1587 = vmatpush.bf16.msra.mxu0 %v1572
            %1588 = vmatpush.bf16.msra.mxu0 %v1571
            %1589 = vmatpush.bf16.msra.mxu0 %v1570
            %1590 = vmatpush.bf16.msra.mxu0 %v1569
            %1591 = vmatpush.bf16.msra.mxu0 %v1568
            %1592 = vmatmul.bf16.gmra.mxu0 %v1535
            %v1593 = vpop.f32.mrf.mxu0
            %v1594 = vadd.f32 0.0, %v1593
            %v1595 = vpop.f32.mrf.mxu0
            %1596 = vdwg.mxu0
            %v1597 = vadd.f32 %v1534, %v1594
            %1598 = vst [vmem:[#allocation3] sm:$0x3] %v1597
            %p1599 = scmp.eq.s32.totalorder %s35, 1
            // Predicated region
            $region101: #{tpu_custom_call.1} parent=95 // pred_check
              %p1600 = pneg %p1599
            $region102: #{tpu_custom_call.1} parent=95 // pred_check_branch
              %1602 = sbr.rel (%p1600) target = $region104
            $region103: #{tpu_custom_call.1} parent=95 // pred_region
              %v1603 = vld [vmem:[#allocation3] sm:$0x3]
              %v1604 = vld [vmem:[%s3] sm:$0x3]
              %1606 = vset.pattern.permute.xlu0 0
              %1607 = vperm.xlu0 %1606, %v1604
              %v1608 = vpop.permute.xlu0 %1607
              %v1610 = vmul.f32 %v1603, %v1608
              %v1611 = vpack.c.bf16 %v1610, %v1610
              %v1612 = vld [vmem:[#allocation9] sm:$0xf]
              %v1613 = vld [vmem:[#allocation9 + $0x4] sm:$0xf]
              %v1614 = vld [vmem:[#allocation9 + $0x8] sm:$0xf]
              %v1615 = vld [vmem:[#allocation9 + $0xc] sm:$0xf]
              %v1616 = vld [vmem:[#allocation9 + $0x10] sm:$0xf]
              %v1617 = vld [vmem:[#allocation9 + $0x14] sm:$0xf]
              %v1618 = vld [vmem:[#allocation9 + $0x18] sm:$0xf]
              %v1619 = vld [vmem:[#allocation9 + $0x1c] sm:$0xf]
              %v1620 = vld [vmem:[#allocation9 + $0x20] sm:$0xf]
              %v1621 = vld [vmem:[#allocation9 + $0x24] sm:$0xf]
              %v1622 = vld [vmem:[#allocation9 + $0x28] sm:$0xf]
              %v1623 = vld [vmem:[#allocation9 + $0x2c] sm:$0xf]
              %v1624 = vld [vmem:[#allocation9 + $0x30] sm:$0xf]
              %v1625 = vld [vmem:[#allocation9 + $0x34] sm:$0xf]
              %v1626 = vld [vmem:[#allocation9 + $0x38] sm:$0xf]
              %v1627 = vld [vmem:[#allocation9 + $0x3c] sm:$0xf]
              %v1628 = vld [vmem:[%s11] sm:$0x1]
              %v1630 = vperm.slane %v1628, 0
              %v1648 = vunpack.c.l.b16 %v1612
              %v1649 = vunpack.c.l.b16 %v1613
              %v1650 = vunpack.c.l.b16 %v1614
              %v1651 = vunpack.c.l.b16 %v1615
              %v1652 = vunpack.c.l.b16 %v1616
              %v1653 = vunpack.c.l.b16 %v1617
              %v1654 = vunpack.c.l.b16 %v1618
              %v1655 = vunpack.c.l.b16 %v1619
              %v1656 = vunpack.c.l.b16 %v1620
              %v1657 = vunpack.c.l.b16 %v1621
              %v1658 = vunpack.c.l.b16 %v1622
              %v1659 = vunpack.c.l.b16 %v1623
              %v1660 = vunpack.c.l.b16 %v1624
              %v1661 = vunpack.c.l.b16 %v1625
              %v1662 = vunpack.c.l.b16 %v1626
              %v1663 = vunpack.c.l.b16 %v1627
              %v1664 = vpack.c.b16 %v1649, %v1648
              %v1665 = vpack.c.b16 %v1651, %v1650
              %v1666 = vpack.c.b16 %v1653, %v1652
              %v1667 = vpack.c.b16 %v1655, %v1654
              %v1668 = vpack.c.b16 %v1657, %v1656
              %v1669 = vpack.c.b16 %v1659, %v1658
              %v1670 = vpack.c.b16 %v1661, %v1660
              %v1671 = vpack.c.b16 %v1663, %v1662
              %1680 = vmatpush.bf16.msra.mxu0 %v1671
              %1681 = vmatpush.bf16.msra.mxu0 %v1670
              %1682 = vmatpush.bf16.msra.mxu0 %v1669
              %1683 = vmatpush.bf16.msra.mxu0 %v1668
              %1684 = vmatpush.bf16.msra.mxu0 %v1667
              %1685 = vmatpush.bf16.msra.mxu0 %v1666
              %1686 = vmatpush.bf16.msra.mxu0 %v1665
              %1687 = vmatpush.bf16.msra.mxu0 %v1664
              %1688 = vmatmul.bf16.gmra.mxu0 %v1611
              %v1689 = vpop.f32.mrf.mxu0
              %v1690 = vadd.f32 %v1630, %v1689
              %v1691 = vpop.f32.mrf.mxu0
              %1692 = vdwg.mxu0
              %1693 = vst [vmem:[#allocation10] sm:$0x3] %v1690
            $region104: #{tpu_custom_call.1} parent=95 // pred_fallthru
              _
          $region96: #{tpu_custom_call.1} parent=87 // pred_fallthru
            _
        $region88: #{tpu_custom_call.1} parent=67 // pred_fallthru
          _
        // Predicated region
        $region105: #{tpu_custom_call.1} parent=67 // pred_check
          %p1694 = pneg %p369
        $region106: #{tpu_custom_call.1} parent=67 // pred_check_branch
          %1696 = sbr.rel (%p1694) target = $region108
        $region107: #{tpu_custom_call.1} parent=67 // pred_region
          %1698 = vsyncadd [#allocation6], 0
          %s1700 = sshll.u32 [#allocation10], 4
          %s1701 = int_to_ptr.vmem [resolvable:$true] %s1700
          %s1702 = sshll.u32 %s12, 4
          %s1703 = int_to_ptr.hbm [resolvable:$true] %s1702
          %1705 = dma.vmem_to_hbm [thread:$0]  %s1701, 32, %s1703, [#allocation6]
        $region108: #{tpu_custom_call.1} parent=67 // pred_fallthru
          _
        // Predicated region
        $region109: #{tpu_custom_call.1} parent=67 // pred_check
          %p1706 = pneg %p369
        $region110: #{tpu_custom_call.1} parent=67 // pred_check_branch
          %1708 = sbr.rel (%p1706) target = $region112
        $region111: #{tpu_custom_call.1} parent=67 // pred_region
          %1710 = dma.done [#allocation6], 32
        $region112: #{tpu_custom_call.1} parent=67 // pred_fallthru
          _
      $region68: #{tpu_custom_call.1} parent=5 // pred_fallthru
        _
      %p1711 = scmp.le.s32.totalorder 2, %s25
      // Predicated region
      $region113: #{tpu_custom_call.1} parent=5 // pred_check
        %p1712 = pneg %p1711
      $region114: #{tpu_custom_call.1} parent=5 // pred_check_branch
        %1714 = sbr.rel (%p1712) target = $region116
      $region115: #{tpu_custom_call.1} parent=5 // pred_region
        %s1715 = ssub.s32 %s25, 2
      $region116: #{tpu_custom_call.1} parent=5 // pred_fallthru
        _
    $region6: #{tpu_custom_call.1} parent=1 // loop_footer
      %s29 = sadd.s32 1, %s25
    $region7: #{tpu_custom_call.1} parent=1 // loop_footer_branch
      %24 = sbr.rel target = $region3
    $region8: #{tpu_custom_call.1} parent=1 // loop_exit
      _
    %1716 = vsyncpa [#allocation5], 1
    %s1717 = scalar_lea.sflag [#allocation5], 1
    %1718 = vsyncpa %s1717, 1
    %1719 = vsyncpa [#allocation8], 1
    %s1720 = scalar_lea.sflag [#allocation8], 1
    %1721 = vsyncpa %s1720, 1
    %1722 = vsyncpa [#allocation6], 1
    %s1723 = scalar_lea.sflag [#allocation6], 1
    %1724 = vsyncpa %s1723, 1

</llo_original>
